<compile_context>
chip_gen: v7x
topology: tpu7x:2x2x1
jax: 0.10.0
libtpu: 0.0.40
codegen_flags: <defaults>
</compile_context>

<pallas_src>
import functools

import jax
import jax.numpy as jnp
from jax.experimental import pallas as pl
from jax.experimental.pallas import tpu as pltpu

# ---------------- model config (small, synthetic ViT like CLIP's encode_image) -------
BATCH = 2
IN_CH = 3
IMG = 16
PATCH = 8
GRID = IMG // PATCH            # 2
N_PATCHES = GRID * GRID        # 4
SEQ = N_PATCHES + 1            # 5 (class token prepended)
WIDTH = 32                     # transformer hidden dim
HEADS = 4
HEAD_DIM = WIDTH // HEADS      # 8
MLP_DIM = 4 * WIDTH            # 128
LAYERS = 2
OUT_DIM = 16                   # CLIP image-embed dim (visual.proj output)
EPS = 1e-5


# ---------------------------------- fused Pallas kernel ------------------------------
def clip_encoder_kernel(patches_ref, base_ref, mask_ref, conv_w_ref,
                        ln_pre_g_ref, ln_pre_b_ref,
                        ln1_g_ref, ln1_b_ref, wqkv_ref, bqkv_ref, wo_ref, bo_ref,
                        ln2_g_ref, ln2_b_ref, w1_ref, b1_ref, w2_ref, b2_ref,
                        ln_post_g_ref, ln_post_b_ref, proj_ref,
                        o_ref, *, num_heads, num_layers, batch, seq):
    def ln(v, g, b):
        # LayerNorm stats kept in f32 (biased variance, like torch.nn.LayerNorm).
        mu = jnp.mean(v, axis=-1, keepdims=True)
        var = jnp.mean((v - mu) ** 2, axis=-1, keepdims=True)
        return (v - mu) * jax.lax.rsqrt(var + EPS) * g + b

    def mm(a, w):
        # bf16 operands on the MXU, f32 accumulation; weights are pre-transposed [K, N].
        return jnp.dot(a.astype(jnp.bfloat16), w, preferred_element_type=jnp.float32)

    # ---- patch embedding + class token + positional embedding --------------------
    # `patches` has a zero row at every class-token slot; `base` carries cls_emb + pos.
    tok = mm(patches_ref[...], conv_w_ref[...]) + base_ref[...]          # [B*S, D] f32
    tok = ln(tok, ln_pre_g_ref[...], ln_pre_b_ref[...])                  # ln_pre

    bs, d = tok.shape
    hd = d // num_heads
    scale = hd ** -0.5
    mask = mask_ref[...]                 # [B*S, B*S] additive block-diagonal mask (f32)

    for l in range(num_layers):          # static unroll over transformer layers
        # ---------------- multi-head self-attention ----------------
        h = ln(tok, ln1_g_ref[l], ln1_b_ref[l])
        qkv = mm(h, wqkv_ref[l]) + bqkv_ref[l]                           # [B*S, 3D] f32

        def split_heads(off):
            # heads -> leading batch dim for one batched dot_general: [H, B*S, hd]
            return jnp.stack(
                [qkv[:, off + hh * hd:off + (hh + 1) * hd] for hh in range(num_heads)],
                axis=0).astype(jnp.bfloat16)

        q = split_heads(0)
        k = split_heads(d)
        v = split_heads(2 * d)

        scores = jnp.einsum('hqd,hkd->hqk', q, k,
                            preferred_element_type=jnp.float32) * scale  # [H, B*S, B*S]
        scores = scores + mask           # no attention across different images
        scores = scores - jnp.max(scores, axis=-1, keepdims=True)
        p = jnp.exp(scores)
        p = p * pl.reciprocal(jnp.sum(p, axis=-1, keepdims=True), approx=True)
        ctx = jnp.einsum('hqk,hkd->hqd', p.astype(jnp.bfloat16), v,
                         preferred_element_type=jnp.float32)             # [H, B*S, hd]
        attn = jnp.concatenate([ctx[hh] for hh in range(num_heads)], axis=-1)  # [B*S, D]
        tok = tok + mm(attn, wo_ref[l]) + bo_ref[l]

        # ---------------- MLP with QuickGELU ----------------
        h = ln(tok, ln2_g_ref[l], ln2_b_ref[l])
        h = mm(h, w1_ref[l]) + b1_ref[l]                                 # [B*S, MLP]
        h = h * jax.nn.sigmoid(1.702 * h)                                # QuickGELU (f32)
        tok = tok + mm(h, w2_ref[l]) + b2_ref[l]

    # ---------------- ln_post on class tokens + projection (fused head) ------------
    cls = jnp.concatenate([tok[b * seq:b * seq + 1, :] for b in range(batch)], axis=0)
    cls = ln(cls, ln_post_g_ref[...], ln_post_b_ref[...])                # [B, D]
    o_ref[...] = jnp.dot(cls.astype(jnp.bfloat16), proj_ref[...],
                         preferred_element_type=jnp.float32)             # [B, OUT]


# ---------------------------------- wrapper -------------------------------------------
def extract_patches(x):
    # glue: NCHW -> [B, N, C*P*P], matching Conv2d(stride=PATCH) weight flattening order
    B, C, H, W = x.shape
    x = x.reshape(B, C, GRID, PATCH, GRID, PATCH)
    x = x.transpose(0, 2, 4, 1, 3, 5)          # [B, gh, gw, C, P, P]
    return x.reshape(B, N_PATCHES, C * PATCH * PATCH)


def clip_encode_image(x, params):
    B = x.shape[0]
    cpp = IN_CH * PATCH * PATCH

    # ---- one-time layout glue (pure reshape/pad in JAX; all compute is in the kernel)
    patches = extract_patches(x)                                    # [B, N, CPP]
    patches = jnp.pad(patches, ((0, 0), (1, 0), (0, 0)))            # zero row at cls slot
    patches = patches.reshape(B * SEQ, cpp).astype(jnp.bfloat16)    # [B*S, CPP]

    cls_row = jnp.pad(params["cls_emb"], ((0, 0), (0, SEQ - 1), (0, 0)))  # cls at row 0
    base = params["pos_emb"] + cls_row                              # [1, S, D]
    base = jnp.broadcast_to(base, (B, SEQ, WIDTH)).reshape(B * SEQ, WIDTH)

    # additive block-diagonal mask: tokens only attend within their own image
    bids = jnp.arange(B * SEQ) // SEQ
    attn_mask = jnp.where(bids[:, None] == bids[None, :], 0.0, -1e30).astype(jnp.float32)

    kernel = functools.partial(clip_encoder_kernel, num_heads=HEADS,
                               num_layers=LAYERS, batch=B, seq=SEQ)
    # TODO(synk): at real CLIP dims (D=768+, S=257) the per-layer weights should be tiled
    # over a layer/K grid axis (v7x VMEM = 64 MiB) and the grid shaped to feed both TCs.
    return pl.pallas_call(
        kernel,
        out_shape=jax.ShapeDtypeStruct((B, OUT_DIM), jnp.float32),
        compiler_params=pltpu.CompilerParams(vmem_limit_bytes=32 * 1024 * 1024),
    )(patches, base, attn_mask,
      params["conv_w_t"],
      params["ln_pre_g"], params["ln_pre_b"],
      params["ln1_g"], params["ln1_b"], params["wqkv_t"], params["bqkv"],
      params["wo_t"], params["bo"],
      params["ln2_g"], params["ln2_b"], params["w1_t"], params["b1"],
      params["w2_t"], params["b2"],
      params["ln_post_g"], params["ln_post_b"], params["proj"])


# ---------------------------------- parameters ----------------------------------------
def init_params(key):
    ks = iter(jax.random.split(key, 64))
    nrm = lambda shape, s=0.02: (s * jax.random.normal(next(ks), shape)).astype(jnp.float32)

    # Per-layer weights generated in PyTorch orientation, pre-transposed once to [K, N]
    # (no in-kernel transposes), stacked over layers; matmul weights stored in bf16.
    ln1_g, ln1_b, wqkv_t, bqkv, wo_t, bo = [], [], [], [], [], []
    ln2_g, ln2_b, w1_t, b1, w2_t, b2 = [], [], [], [], [], []
    for _ in range(LAYERS):
        ln1_g.append(jnp.ones((1, WIDTH), jnp.float32))
        ln1_b.append(jnp.zeros((1, WIDTH), jnp.float32))
        wqkv_t.append(nrm((3 * WIDTH, WIDTH)).T.astype(jnp.bfloat16))    # [D, 3D]
        bqkv.append(jnp.zeros((1, 3 * WIDTH), jnp.float32))
        wo_t.append(nrm((WIDTH, WIDTH)).T.astype(jnp.bfloat16))          # [D, D]
        bo.append(jnp.zeros((1, WIDTH), jnp.float32))
        ln2_g.append(jnp.ones((1, WIDTH), jnp.float32))
        ln2_b.append(jnp.zeros((1, WIDTH), jnp.float32))
        w1_t.append(nrm((MLP_DIM, WIDTH)).T.astype(jnp.bfloat16))        # [D, MLP]
        b1.append(jnp.zeros((1, MLP_DIM), jnp.float32))
        w2_t.append(nrm((WIDTH, MLP_DIM)).T.astype(jnp.bfloat16))        # [MLP, D]
        b2.append(jnp.zeros((1, WIDTH), jnp.float32))

    return {
        "conv_w_t": nrm((WIDTH, IN_CH * PATCH * PATCH)).T.astype(jnp.bfloat16),  # [CPP, D]
        "cls_emb": nrm((1, 1, WIDTH)),
        "pos_emb": nrm((1, SEQ, WIDTH)),
        "ln_pre_g": jnp.ones((1, WIDTH), jnp.float32),
        "ln_pre_b": jnp.zeros((1, WIDTH), jnp.float32),
        "ln_post_g": jnp.ones((1, WIDTH), jnp.float32),
        "ln_post_b": jnp.zeros((1, WIDTH), jnp.float32),
        "proj": nrm((WIDTH, OUT_DIM)).astype(jnp.bfloat16),              # [D, OUT]
        "ln1_g": jnp.stack(ln1_g), "ln1_b": jnp.stack(ln1_b),
        "wqkv_t": jnp.stack(wqkv_t), "bqkv": jnp.stack(bqkv),
        "wo_t": jnp.stack(wo_t), "bo": jnp.stack(bo),
        "ln2_g": jnp.stack(ln2_g), "ln2_b": jnp.stack(ln2_b),
        "w1_t": jnp.stack(w1_t), "b1": jnp.stack(b1),
        "w2_t": jnp.stack(w2_t), "b2": jnp.stack(b2),
    }


if __name__ == "__main__":
    key = jax.random.PRNGKey(0)
    x = jax.random.normal(key, (BATCH, IN_CH, IMG, IMG), dtype=jnp.float32)  # NCHW
    params = init_params(jax.random.PRNGKey(1))
    feat = jax.jit(clip_encode_image)(x, params)
    feat = jax.block_until_ready(feat)
    assert feat.shape == (BATCH, OUT_DIM), feat.shape
    assert jnp.all(jnp.isfinite(feat))
    print("KERNEL_OK")
</pallas_src>

<mosaic_0001>
module attributes {stable_mosaic.version = 11 : i64} {
  func.func @clip_encoder_kernel(%arg0: memref<10x192xbf16, #tpu.memory_space<vmem>>, %arg1: memref<10x32xf32, #tpu.memory_space<vmem>>, %arg2: memref<10x10xf32, #tpu.memory_space<vmem>>, %arg3: memref<192x32xbf16, #tpu.memory_space<vmem>>, %arg4: memref<1x32xf32, #tpu.memory_space<vmem>>, %arg5: memref<1x32xf32, #tpu.memory_space<vmem>>, %arg6: memref<2x1x32xf32, #tpu.memory_space<vmem>>, %arg7: memref<2x1x32xf32, #tpu.memory_space<vmem>>, %arg8: memref<2x32x96xbf16, #tpu.memory_space<vmem>>, %arg9: memref<2x1x96xf32, #tpu.memory_space<vmem>>, %arg10: memref<2x32x32xbf16, #tpu.memory_space<vmem>>, %arg11: memref<2x1x32xf32, #tpu.memory_space<vmem>>, %arg12: memref<2x1x32xf32, #tpu.memory_space<vmem>>, %arg13: memref<2x1x32xf32, #tpu.memory_space<vmem>>, %arg14: memref<2x32x128xbf16, #tpu.memory_space<vmem>>, %arg15: memref<2x1x128xf32, #tpu.memory_space<vmem>>, %arg16: memref<2x128x32xbf16, #tpu.memory_space<vmem>>, %arg17: memref<2x1x32xf32, #tpu.memory_space<vmem>>, %arg18: memref<1x32xf32, #tpu.memory_space<vmem>>, %arg19: memref<1x32xf32, #tpu.memory_space<vmem>>, %arg20: memref<32x16xbf16, #tpu.memory_space<vmem>>, %arg21: memref<2x16xf32, #tpu.memory_space<vmem>>) attributes {dimension_semantics = [], scalar_prefetch = 0 : i64, scratch_operands = 0 : i64, tpu.core_type = #tpu.core_type<tc>} {
    %c0 = arith.constant 0 : index
    %c0_0 = arith.constant 0 : index
    %0 = vector.load %arg0[%c0, %c0_0] : memref<10x192xbf16, #tpu.memory_space<vmem>>, vector<10x192xbf16>
    %c0_1 = arith.constant 0 : index
    %c0_2 = arith.constant 0 : index
    %1 = vector.load %arg3[%c0_1, %c0_2] : memref<192x32xbf16, #tpu.memory_space<vmem>>, vector<192x32xbf16>
    %cst = arith.constant dense<0.000000e+00> : vector<10x32xf32>
    %2 = tpu.matmul %0, %1, %cst {dimension_numbers = #tpu.dot_dimension_numbers<[1], [0], [0], [1], [0, 0, 1, 1], [], []>} : vector<10x192xbf16>, vector<192x32xbf16>, vector<10x32xf32> -> vector<10x32xf32>
    %c0_3 = arith.constant 0 : index
    %c0_4 = arith.constant 0 : index
    %3 = vector.load %arg1[%c0_3, %c0_4] : memref<10x32xf32, #tpu.memory_space<vmem>>, vector<10x32xf32>
    %4 = arith.addf %2, %3 : vector<10x32xf32>
    %c0_5 = arith.constant 0 : index
    %c0_6 = arith.constant 0 : index
    %5 = vector.load %arg4[%c0_5, %c0_6] : memref<1x32xf32, #tpu.memory_space<vmem>>, vector<1x32xf32>
    %c0_7 = arith.constant 0 : index
    %c0_8 = arith.constant 0 : index
    %6 = vector.load %arg5[%c0_7, %c0_8] : memref<1x32xf32, #tpu.memory_space<vmem>>, vector<1x32xf32>
    %cst_9 = arith.constant dense<0.000000e+00> : vector<10xf32>
    %7 = vector.multi_reduction <add>, %4, %cst_9 [1] : vector<10x32xf32> to vector<10xf32>
    %8 = vector.shape_cast %7 : vector<10xf32> to vector<10x1xf32>
    %cst_10 = arith.constant 3.200000e+01 : f32
    %9 = vector.broadcast %cst_10 : f32 to vector<10x1xf32>
    %10 = arith.divf %8, %9 : vector<10x1xf32>
    %11 = vector.broadcast %10 : vector<10x1xf32> to vector<10x32xf32>
    %12 = arith.subf %4, %11 : vector<10x32xf32>
    %13 = arith.mulf %12, %12 : vector<10x32xf32>
    %cst_11 = arith.constant dense<0.000000e+00> : vector<10xf32>
    %14 = vector.multi_reduction <add>, %13, %cst_11 [1] : vector<10x32xf32> to vector<10xf32>
    %15 = vector.shape_cast %14 : vector<10xf32> to vector<10x1xf32>
    %cst_12 = arith.constant 3.200000e+01 : f32
    %16 = vector.broadcast %cst_12 : f32 to vector<10x1xf32>
    %17 = arith.divf %15, %16 : vector<10x1xf32>
    %18 = vector.broadcast %10 : vector<10x1xf32> to vector<10x32xf32>
    %19 = arith.subf %4, %18 : vector<10x32xf32>
    %cst_13 = arith.constant 9.99999974E-6 : f32
    %20 = vector.broadcast %cst_13 : f32 to vector<10x1xf32>
    %21 = arith.addf %17, %20 : vector<10x1xf32>
    %22 = math.rsqrt %21 : vector<10x1xf32>
    %23 = vector.broadcast %22 : vector<10x1xf32> to vector<10x32xf32>
    %24 = arith.mulf %19, %23 : vector<10x32xf32>
    %25 = vector.broadcast %5 : vector<1x32xf32> to vector<10x32xf32>
    %26 = arith.mulf %24, %25 : vector<10x32xf32>
    %27 = vector.broadcast %6 : vector<1x32xf32> to vector<10x32xf32>
    %28 = arith.addf %26, %27 : vector<10x32xf32>
    %c0_14 = arith.constant 0 : index
    %c0_15 = arith.constant 0 : index
    %29 = vector.load %arg2[%c0_14, %c0_15] : memref<10x10xf32, #tpu.memory_space<vmem>>, vector<10x10xf32>
    %c0_16 = arith.constant 0 : index
    %c0_17 = arith.constant 0 : index
    %c0_18 = arith.constant 0 : index
    %30 = vector.load %arg6[%c0_16, %c0_17, %c0_18] : memref<2x1x32xf32, #tpu.memory_space<vmem>>, vector<1x1x32xf32>
    %31 = vector.shape_cast %30 : vector<1x1x32xf32> to vector<1x32xf32>
    %c0_19 = arith.constant 0 : index
    %c0_20 = arith.constant 0 : index
    %c0_21 = arith.constant 0 : index
    %32 = vector.load %arg7[%c0_19, %c0_20, %c0_21] : memref<2x1x32xf32, #tpu.memory_space<vmem>>, vector<1x1x32xf32>
    %33 = vector.shape_cast %32 : vector<1x1x32xf32> to vector<1x32xf32>
    %cst_22 = arith.constant dense<0.000000e+00> : vector<10xf32>
    %34 = vector.multi_reduction <add>, %28, %cst_22 [1] : vector<10x32xf32> to vector<10xf32>
    %35 = vector.shape_cast %34 : vector<10xf32> to vector<10x1xf32>
    %cst_23 = arith.constant 3.200000e+01 : f32
    %36 = vector.broadcast %cst_23 : f32 to vector<10x1xf32>
    %37 = arith.divf %35, %36 : vector<10x1xf32>
    %38 = vector.broadcast %37 : vector<10x1xf32> to vector<10x32xf32>
    %39 = arith.subf %28, %38 : vector<10x32xf32>
    %40 = arith.mulf %39, %39 : vector<10x32xf32>
    %cst_24 = arith.constant dense<0.000000e+00> : vector<10xf32>
    %41 = vector.multi_reduction <add>, %40, %cst_24 [1] : vector<10x32xf32> to vector<10xf32>
    %42 = vector.shape_cast %41 : vector<10xf32> to vector<10x1xf32>
    %cst_25 = arith.constant 3.200000e+01 : f32
    %43 = vector.broadcast %cst_25 : f32 to vector<10x1xf32>
    %44 = arith.divf %42, %43 : vector<10x1xf32>
    %45 = vector.broadcast %37 : vector<10x1xf32> to vector<10x32xf32>
    %46 = arith.subf %28, %45 : vector<10x32xf32>
    %cst_26 = arith.constant 9.99999974E-6 : f32
    %47 = vector.broadcast %cst_26 : f32 to vector<10x1xf32>
    %48 = arith.addf %44, %47 : vector<10x1xf32>
    %49 = math.rsqrt %48 : vector<10x1xf32>
    %50 = vector.broadcast %49 : vector<10x1xf32> to vector<10x32xf32>
    %51 = arith.mulf %46, %50 : vector<10x32xf32>
    %52 = vector.broadcast %31 : vector<1x32xf32> to vector<10x32xf32>
    %53 = arith.mulf %51, %52 : vector<10x32xf32>
    %54 = vector.broadcast %33 : vector<1x32xf32> to vector<10x32xf32>
    %55 = arith.addf %53, %54 : vector<10x32xf32>
    %c0_27 = arith.constant 0 : index
    %c0_28 = arith.constant 0 : index
    %c0_29 = arith.constant 0 : index
    %56 = vector.load %arg8[%c0_27, %c0_28, %c0_29] : memref<2x32x96xbf16, #tpu.memory_space<vmem>>, vector<1x32x96xbf16>
    %57 = vector.shape_cast %56 : vector<1x32x96xbf16> to vector<32x96xbf16>
    %58 = arith.truncf %55 : vector<10x32xf32> to vector<10x32xbf16>
    %cst_30 = arith.constant dense<0.000000e+00> : vector<10x96xf32>
    %59 = tpu.matmul %58, %57, %cst_30 {dimension_numbers = #tpu.dot_dimension_numbers<[1], [0], [0], [1], [0, 0, 1, 1], [], []>} : vector<10x32xbf16>, vector<32x96xbf16>, vector<10x96xf32> -> vector<10x96xf32>
    %c0_31 = arith.constant 0 : index
    %c0_32 = arith.constant 0 : index
    %c0_33 = arith.constant 0 : index
    %60 = vector.load %arg9[%c0_31, %c0_32, %c0_33] : memref<2x1x96xf32, #tpu.memory_space<vmem>>, vector<1x1x96xf32>
    %61 = vector.shape_cast %60 : vector<1x1x96xf32> to vector<1x96xf32>
    %62 = vector.broadcast %61 : vector<1x96xf32> to vector<10x96xf32>
    %63 = arith.addf %59, %62 : vector<10x96xf32>
    %64 = vector.extract_strided_slice %63 {offsets = [0, 0], sizes = [10, 8], strides = [1, 1]} : vector<10x96xf32> to vector<10x8xf32>
    %65 = vector.extract_strided_slice %63 {offsets = [0, 8], sizes = [10, 8], strides = [1, 1]} : vector<10x96xf32> to vector<10x8xf32>
    %66 = vector.extract_strided_slice %63 {offsets = [0, 16], sizes = [10, 8], strides = [1, 1]} : vector<10x96xf32> to vector<10x8xf32>
    %67 = vector.extract_strided_slice %63 {offsets = [0, 24], sizes = [10, 8], strides = [1, 1]} : vector<10x96xf32> to vector<10x8xf32>
    %68 = vector.shape_cast %64 : vector<10x8xf32> to vector<1x10x8xf32>
    %69 = vector.shape_cast %65 : vector<10x8xf32> to vector<1x10x8xf32>
    %70 = vector.shape_cast %66 : vector<10x8xf32> to vector<1x10x8xf32>
    %71 = vector.shape_cast %67 : vector<10x8xf32> to vector<1x10x8xf32>
    %72 = tpu.concatenate %68, %69, %70, %71 in 0 : vector<1x10x8xf32>, vector<1x10x8xf32>, vector<1x10x8xf32>, vector<1x10x8xf32> -> vector<4x10x8xf32>
    %73 = arith.truncf %72 : vector<4x10x8xf32> to vector<4x10x8xbf16>
    %74 = vector.extract_strided_slice %63 {offsets = [0, 32], sizes = [10, 8], strides = [1, 1]} : vector<10x96xf32> to vector<10x8xf32>
    %75 = vector.extract_strided_slice %63 {offsets = [0, 40], sizes = [10, 8], strides = [1, 1]} : vector<10x96xf32> to vector<10x8xf32>
    %76 = vector.extract_strided_slice %63 {offsets = [0, 48], sizes = [10, 8], strides = [1, 1]} : vector<10x96xf32> to vector<10x8xf32>
    %77 = vector.extract_strided_slice %63 {offsets = [0, 56], sizes = [10, 8], strides = [1, 1]} : vector<10x96xf32> to vector<10x8xf32>
    %78 = vector.shape_cast %74 : vector<10x8xf32> to vector<1x10x8xf32>
    %79 = vector.shape_cast %75 : vector<10x8xf32> to vector<1x10x8xf32>
    %80 = vector.shape_cast %76 : vector<10x8xf32> to vector<1x10x8xf32>
    %81 = vector.shape_cast %77 : vector<10x8xf32> to vector<1x10x8xf32>
    %82 = tpu.concatenate %78, %79, %80, %81 in 0 : vector<1x10x8xf32>, vector<1x10x8xf32>, vector<1x10x8xf32>, vector<1x10x8xf32> -> vector<4x10x8xf32>
    %83 = arith.truncf %82 : vector<4x10x8xf32> to vector<4x10x8xbf16>
    %84 = vector.extract_strided_slice %63 {offsets = [0, 64], sizes = [10, 8], strides = [1, 1]} : vector<10x96xf32> to vector<10x8xf32>
    %85 = vector.extract_strided_slice %63 {offsets = [0, 72], sizes = [10, 8], strides = [1, 1]} : vector<10x96xf32> to vector<10x8xf32>
    %86 = vector.extract_strided_slice %63 {offsets = [0, 80], sizes = [10, 8], strides = [1, 1]} : vector<10x96xf32> to vector<10x8xf32>
    %87 = vector.extract_strided_slice %63 {offsets = [0, 88], sizes = [10, 8], strides = [1, 1]} : vector<10x96xf32> to vector<10x8xf32>
    %88 = vector.shape_cast %84 : vector<10x8xf32> to vector<1x10x8xf32>
    %89 = vector.shape_cast %85 : vector<10x8xf32> to vector<1x10x8xf32>
    %90 = vector.shape_cast %86 : vector<10x8xf32> to vector<1x10x8xf32>
    %91 = vector.shape_cast %87 : vector<10x8xf32> to vector<1x10x8xf32>
    %92 = tpu.concatenate %88, %89, %90, %91 in 0 : vector<1x10x8xf32>, vector<1x10x8xf32>, vector<1x10x8xf32>, vector<1x10x8xf32> -> vector<4x10x8xf32>
    %93 = arith.truncf %92 : vector<4x10x8xf32> to vector<4x10x8xbf16>
    "tpu.trace_start"() <{level = 10 : i32, message = "hqd,hkd->hqk"}> : () -> ()
    %cst_34 = arith.constant dense<0.000000e+00> : vector<4x10x10xf32>
    %94 = tpu.matmul %73, %83, %cst_34 {dimension_numbers = #tpu.dot_dimension_numbers<[2], [2], [1], [1], [0, 0, 0, 1, 1, 1], [0], [0]>} : vector<4x10x8xbf16>, vector<4x10x8xbf16>, vector<4x10x10xf32> -> vector<4x10x10xf32>
    "tpu.trace_stop"() : () -> ()
    %cst_35 = arith.constant 0.353553385 : f32
    %95 = vector.broadcast %cst_35 : f32 to vector<4x10x10xf32>
    %96 = arith.mulf %94, %95 : vector<4x10x10xf32>
    %97 = vector.shape_cast %29 : vector<10x10xf32> to vector<1x10x10xf32>
    %98 = vector.broadcast %97 : vector<1x10x10xf32> to vector<4x10x10xf32>
    %99 = arith.addf %96, %98 : vector<4x10x10xf32>
    %cst_36 = arith.constant dense<0xFF800000> : vector<4x10xf32>
    %100 = vector.multi_reduction <maximumf>, %99, %cst_36 [2] : vector<4x10x10xf32> to vector<4x10xf32>
    %101 = vector.shape_cast %100 : vector<4x10xf32> to vector<4x10x1xf32>
    %102 = vector.broadcast %101 : vector<4x10x1xf32> to vector<4x10x10xf32>
    %103 = arith.subf %99, %102 : vector<4x10x10xf32>
    %104 = math.exp %103 : vector<4x10x10xf32>
    %cst_37 = arith.constant dense<0.000000e+00> : vector<4x10xf32>
    %105 = vector.multi_reduction <add>, %104, %cst_37 [2] : vector<4x10x10xf32> to vector<4x10xf32>
    %106 = vector.shape_cast %105 : vector<4x10xf32> to vector<4x10x1xf32>
    %107 = tpu.reciprocal %106 {approx = true} : vector<4x10x1xf32> -> vector<4x10x1xf32>
    %108 = vector.broadcast %107 : vector<4x10x1xf32> to vector<4x10x10xf32>
    %109 = arith.mulf %104, %108 : vector<4x10x10xf32>
    %110 = arith.truncf %109 : vector<4x10x10xf32> to vector<4x10x10xbf16>
    "tpu.trace_start"() <{level = 10 : i32, message = "hqk,hkd->hqd"}> : () -> ()
    %cst_38 = arith.constant dense<0.000000e+00> : vector<4x10x8xf32>
    %111 = tpu.matmul %110, %93, %cst_38 {dimension_numbers = #tpu.dot_dimension_numbers<[2], [1], [1], [2], [0, 0, 0, 1, 1, 2], [0], [0]>} : vector<4x10x10xbf16>, vector<4x10x8xbf16>, vector<4x10x8xf32> -> vector<4x10x8xf32>
    "tpu.trace_stop"() : () -> ()
    %112 = vector.extract_strided_slice %111 {offsets = [0, 0, 0], sizes = [1, 10, 8], strides = [1, 1, 1]} : vector<4x10x8xf32> to vector<1x10x8xf32>
    %113 = vector.shape_cast %112 : vector<1x10x8xf32> to vector<10x8xf32>
    %114 = vector.extract_strided_slice %111 {offsets = [1, 0, 0], sizes = [1, 10, 8], strides = [1, 1, 1]} : vector<4x10x8xf32> to vector<1x10x8xf32>
    %115 = vector.shape_cast %114 : vector<1x10x8xf32> to vector<10x8xf32>
    %116 = vector.extract_strided_slice %111 {offsets = [2, 0, 0], sizes = [1, 10, 8], strides = [1, 1, 1]} : vector<4x10x8xf32> to vector<1x10x8xf32>
    %117 = vector.shape_cast %116 : vector<1x10x8xf32> to vector<10x8xf32>
    %118 = vector.extract_strided_slice %111 {offsets = [3, 0, 0], sizes = [1, 10, 8], strides = [1, 1, 1]} : vector<4x10x8xf32> to vector<1x10x8xf32>
    %119 = vector.shape_cast %118 : vector<1x10x8xf32> to vector<10x8xf32>
    %120 = tpu.concatenate %113, %115, %117, %119 in 1 : vector<10x8xf32>, vector<10x8xf32>, vector<10x8xf32>, vector<10x8xf32> -> vector<10x32xf32>
    %c0_39 = arith.constant 0 : index
    %c0_40 = arith.constant 0 : index
    %c0_41 = arith.constant 0 : index
    %121 = vector.load %arg10[%c0_39, %c0_40, %c0_41] : memref<2x32x32xbf16, #tpu.memory_space<vmem>>, vector<1x32x32xbf16>
    %122 = vector.shape_cast %121 : vector<1x32x32xbf16> to vector<32x32xbf16>
    %123 = arith.truncf %120 : vector<10x32xf32> to vector<10x32xbf16>
    %cst_42 = arith.constant dense<0.000000e+00> : vector<10x32xf32>
    %124 = tpu.matmul %123, %122, %cst_42 {dimension_numbers = #tpu.dot_dimension_numbers<[1], [0], [0], [1], [0, 0, 1, 1], [], []>} : vector<10x32xbf16>, vector<32x32xbf16>, vector<10x32xf32> -> vector<10x32xf32>
    %125 = arith.addf %28, %124 : vector<10x32xf32>
    %c0_43 = arith.constant 0 : index
    %c0_44 = arith.constant 0 : index
    %c0_45 = arith.constant 0 : index
    %126 = vector.load %arg11[%c0_43, %c0_44, %c0_45] : memref<2x1x32xf32, #tpu.memory_space<vmem>>, vector<1x1x32xf32>
    %127 = vector.shape_cast %126 : vector<1x1x32xf32> to vector<1x32xf32>
    %128 = vector.broadcast %127 : vector<1x32xf32> to vector<10x32xf32>
    %129 = arith.addf %125, %128 : vector<10x32xf32>
    %c0_46 = arith.constant 0 : index
    %c0_47 = arith.constant 0 : index
    %c0_48 = arith.constant 0 : index
    %130 = vector.load %arg12[%c0_46, %c0_47, %c0_48] : memref<2x1x32xf32, #tpu.memory_space<vmem>>, vector<1x1x32xf32>
    %131 = vector.shape_cast %130 : vector<1x1x32xf32> to vector<1x32xf32>
    %c0_49 = arith.constant 0 : index
    %c0_50 = arith.constant 0 : index
    %c0_51 = arith.constant 0 : index
    %132 = vector.load %arg13[%c0_49, %c0_50, %c0_51] : memref<2x1x32xf32, #tpu.memory_space<vmem>>, vector<1x1x32xf32>
    %133 = vector.shape_cast %132 : vector<1x1x32xf32> to vector<1x32xf32>
    %cst_52 = arith.constant dense<0.000000e+00> : vector<10xf32>
    %134 = vector.multi_reduction <add>, %129, %cst_52 [1] : vector<10x32xf32> to vector<10xf32>
    %135 = vector.shape_cast %134 : vector<10xf32> to vector<10x1xf32>
    %cst_53 = arith.constant 3.200000e+01 : f32
    %136 = vector.broadcast %cst_53 : f32 to vector<10x1xf32>
    %137 = arith.divf %135, %136 : vector<10x1xf32>
    %138 = vector.broadcast %137 : vector<10x1xf32> to vector<10x32xf32>
    %139 = arith.subf %129, %138 : vector<10x32xf32>
    %140 = arith.mulf %139, %139 : vector<10x32xf32>
    %cst_54 = arith.constant dense<0.000000e+00> : vector<10xf32>
    %141 = vector.multi_reduction <add>, %140, %cst_54 [1] : vector<10x32xf32> to vector<10xf32>
    %142 = vector.shape_cast %141 : vector<10xf32> to vector<10x1xf32>
    %cst_55 = arith.constant 3.200000e+01 : f32
    %143 = vector.broadcast %cst_55 : f32 to vector<10x1xf32>
    %144 = arith.divf %142, %143 : vector<10x1xf32>
    %145 = vector.broadcast %137 : vector<10x1xf32> to vector<10x32xf32>
    %146 = arith.subf %129, %145 : vector<10x32xf32>
    %cst_56 = arith.constant 9.99999974E-6 : f32
    %147 = vector.broadcast %cst_56 : f32 to vector<10x1xf32>
    %148 = arith.addf %144, %147 : vector<10x1xf32>
    %149 = math.rsqrt %148 : vector<10x1xf32>
    %150 = vector.broadcast %149 : vector<10x1xf32> to vector<10x32xf32>
    %151 = arith.mulf %146, %150 : vector<10x32xf32>
    %152 = vector.broadcast %131 : vector<1x32xf32> to vector<10x32xf32>
    %153 = arith.mulf %151, %152 : vector<10x32xf32>
    %154 = vector.broadcast %133 : vector<1x32xf32> to vector<10x32xf32>
    %155 = arith.addf %153, %154 : vector<10x32xf32>
    %c0_57 = arith.constant 0 : index
    %c0_58 = arith.constant 0 : index
    %c0_59 = arith.constant 0 : index
    %156 = vector.load %arg14[%c0_57, %c0_58, %c0_59] : memref<2x32x128xbf16, #tpu.memory_space<vmem>>, vector<1x32x128xbf16>
    %157 = vector.shape_cast %156 : vector<1x32x128xbf16> to vector<32x128xbf16>
    %158 = arith.truncf %155 : vector<10x32xf32> to vector<10x32xbf16>
    %cst_60 = arith.constant dense<0.000000e+00> : vector<10x128xf32>
    %159 = tpu.matmul %158, %157, %cst_60 {dimension_numbers = #tpu.dot_dimension_numbers<[1], [0], [0], [1], [0, 0, 1, 1], [], []>} : vector<10x32xbf16>, vector<32x128xbf16>, vector<10x128xf32> -> vector<10x128xf32>
    %c0_61 = arith.constant 0 : index
    %c0_62 = arith.constant 0 : index
    %c0_63 = arith.constant 0 : index
    %160 = vector.load %arg15[%c0_61, %c0_62, %c0_63] : memref<2x1x128xf32, #tpu.memory_space<vmem>>, vector<1x1x128xf32>
    %161 = vector.shape_cast %160 : vector<1x1x128xf32> to vector<1x128xf32>
    %162 = vector.broadcast %161 : vector<1x128xf32> to vector<10x128xf32>
    %163 = arith.addf %159, %162 : vector<10x128xf32>
    %cst_64 = arith.constant 1.702000e+00 : f32
    %164 = vector.broadcast %cst_64 : f32 to vector<10x128xf32>
    %165 = arith.mulf %164, %163 : vector<10x128xf32>
    %166 = arith.negf %165 : vector<10x128xf32>
    %167 = math.exp %166 : vector<10x128xf32>
    %cst_65 = arith.constant 1.000000e+00 : f32
    %168 = vector.broadcast %cst_65 : f32 to vector<10x128xf32>
    %169 = arith.addf %168, %167 : vector<10x128xf32>
    %170 = arith.divf %168, %169 : vector<10x128xf32>
    %171 = arith.mulf %163, %170 : vector<10x128xf32>
    %c0_66 = arith.constant 0 : index
    %c0_67 = arith.constant 0 : index
    %c0_68 = arith.constant 0 : index
    %172 = vector.load %arg16[%c0_66, %c0_67, %c0_68] : memref<2x128x32xbf16, #tpu.memory_space<vmem>>, vector<1x128x32xbf16>
    %173 = vector.shape_cast %172 : vector<1x128x32xbf16> to vector<128x32xbf16>
    %174 = arith.truncf %171 : vector<10x128xf32> to vector<10x128xbf16>
    %cst_69 = arith.constant dense<0.000000e+00> : vector<10x32xf32>
    %175 = tpu.matmul %174, %173, %cst_69 {dimension_numbers = #tpu.dot_dimension_numbers<[1], [0], [0], [1], [0, 0, 1, 1], [], []>} : vector<10x128xbf16>, vector<128x32xbf16>, vector<10x32xf32> -> vector<10x32xf32>
    %176 = arith.addf %129, %175 : vector<10x32xf32>
    %c0_70 = arith.constant 0 : index
    %c0_71 = arith.constant 0 : index
    %c0_72 = arith.constant 0 : index
    %177 = vector.load %arg17[%c0_70, %c0_71, %c0_72] : memref<2x1x32xf32, #tpu.memory_space<vmem>>, vector<1x1x32xf32>
    %178 = vector.shape_cast %177 : vector<1x1x32xf32> to vector<1x32xf32>
    %179 = vector.broadcast %178 : vector<1x32xf32> to vector<10x32xf32>
    %180 = arith.addf %176, %179 : vector<10x32xf32>
    %c1 = arith.constant 1 : index
    %c0_73 = arith.constant 0 : index
    %c0_74 = arith.constant 0 : index
    %181 = vector.load %arg6[%c1, %c0_73, %c0_74] : memref<2x1x32xf32, #tpu.memory_space<vmem>>, vector<1x1x32xf32>
    %182 = vector.shape_cast %181 : vector<1x1x32xf32> to vector<1x32xf32>
    %c1_75 = arith.constant 1 : index
    %c0_76 = arith.constant 0 : index
    %c0_77 = arith.constant 0 : index
    %183 = vector.load %arg7[%c1_75, %c0_76, %c0_77] : memref<2x1x32xf32, #tpu.memory_space<vmem>>, vector<1x1x32xf32>
    %184 = vector.shape_cast %183 : vector<1x1x32xf32> to vector<1x32xf32>
    %cst_78 = arith.constant dense<0.000000e+00> : vector<10xf32>
    %185 = vector.multi_reduction <add>, %180, %cst_78 [1] : vector<10x32xf32> to vector<10xf32>
    %186 = vector.shape_cast %185 : vector<10xf32> to vector<10x1xf32>
    %cst_79 = arith.constant 3.200000e+01 : f32
    %187 = vector.broadcast %cst_79 : f32 to vector<10x1xf32>
    %188 = arith.divf %186, %187 : vector<10x1xf32>
    %189 = vector.broadcast %188 : vector<10x1xf32> to vector<10x32xf32>
    %190 = arith.subf %180, %189 : vector<10x32xf32>
    %191 = arith.mulf %190, %190 : vector<10x32xf32>
    %cst_80 = arith.constant dense<0.000000e+00> : vector<10xf32>
    %192 = vector.multi_reduction <add>, %191, %cst_80 [1] : vector<10x32xf32> to vector<10xf32>
    %193 = vector.shape_cast %192 : vector<10xf32> to vector<10x1xf32>
    %cst_81 = arith.constant 3.200000e+01 : f32
    %194 = vector.broadcast %cst_81 : f32 to vector<10x1xf32>
    %195 = arith.divf %193, %194 : vector<10x1xf32>
    %196 = vector.broadcast %188 : vector<10x1xf32> to vector<10x32xf32>
    %197 = arith.subf %180, %196 : vector<10x32xf32>
    %cst_82 = arith.constant 9.99999974E-6 : f32
    %198 = vector.broadcast %cst_82 : f32 to vector<10x1xf32>
    %199 = arith.addf %195, %198 : vector<10x1xf32>
    %200 = math.rsqrt %199 : vector<10x1xf32>
    %201 = vector.broadcast %200 : vector<10x1xf32> to vector<10x32xf32>
    %202 = arith.mulf %197, %201 : vector<10x32xf32>
    %203 = vector.broadcast %182 : vector<1x32xf32> to vector<10x32xf32>
    %204 = arith.mulf %202, %203 : vector<10x32xf32>
    %205 = vector.broadcast %184 : vector<1x32xf32> to vector<10x32xf32>
    %206 = arith.addf %204, %205 : vector<10x32xf32>
    %c1_83 = arith.constant 1 : index
    %c0_84 = arith.constant 0 : index
    %c0_85 = arith.constant 0 : index
    %207 = vector.load %arg8[%c1_83, %c0_84, %c0_85] : memref<2x32x96xbf16, #tpu.memory_space<vmem>>, vector<1x32x96xbf16>
    %208 = vector.shape_cast %207 : vector<1x32x96xbf16> to vector<32x96xbf16>
    %209 = arith.truncf %206 : vector<10x32xf32> to vector<10x32xbf16>
    %cst_86 = arith.constant dense<0.000000e+00> : vector<10x96xf32>
    %210 = tpu.matmul %209, %208, %cst_86 {dimension_numbers = #tpu.dot_dimension_numbers<[1], [0], [0], [1], [0, 0, 1, 1], [], []>} : vector<10x32xbf16>, vector<32x96xbf16>, vector<10x96xf32> -> vector<10x96xf32>
    %c1_87 = arith.constant 1 : index
    %c0_88 = arith.constant 0 : index
    %c0_89 = arith.constant 0 : index
    %211 = vector.load %arg9[%c1_87, %c0_88, %c0_89] : memref<2x1x96xf32, #tpu.memory_space<vmem>>, vector<1x1x96xf32>
    %212 = vector.shape_cast %211 : vector<1x1x96xf32> to vector<1x96xf32>
    %213 = vector.broadcast %212 : vector<1x96xf32> to vector<10x96xf32>
    %214 = arith.addf %210, %213 : vector<10x96xf32>
    %215 = vector.extract_strided_slice %214 {offsets = [0, 0], sizes = [10, 8], strides = [1, 1]} : vector<10x96xf32> to vector<10x8xf32>
    %216 = vector.extract_strided_slice %214 {offsets = [0, 8], sizes = [10, 8], strides = [1, 1]} : vector<10x96xf32> to vector<10x8xf32>
    %217 = vector.extract_strided_slice %214 {offsets = [0, 16], sizes = [10, 8], strides = [1, 1]} : vector<10x96xf32> to vector<10x8xf32>
    %218 = vector.extract_strided_slice %214 {offsets = [0, 24], sizes = [10, 8], strides = [1, 1]} : vector<10x96xf32> to vector<10x8xf32>
    %219 = vector.shape_cast %215 : vector<10x8xf32> to vector<1x10x8xf32>
    %220 = vector.shape_cast %216 : vector<10x8xf32> to vector<1x10x8xf32>
    %221 = vector.shape_cast %217 : vector<10x8xf32> to vector<1x10x8xf32>
    %222 = vector.shape_cast %218 : vector<10x8xf32> to vector<1x10x8xf32>
    %223 = tpu.concatenate %219, %220, %221, %222 in 0 : vector<1x10x8xf32>, vector<1x10x8xf32>, vector<1x10x8xf32>, vector<1x10x8xf32> -> vector<4x10x8xf32>
    %224 = arith.truncf %223 : vector<4x10x8xf32> to vector<4x10x8xbf16>
    %225 = vector.extract_strided_slice %214 {offsets = [0, 32], sizes = [10, 8], strides = [1, 1]} : vector<10x96xf32> to vector<10x8xf32>
    %226 = vector.extract_strided_slice %214 {offsets = [0, 40], sizes = [10, 8], strides = [1, 1]} : vector<10x96xf32> to vector<10x8xf32>
    %227 = vector.extract_strided_slice %214 {offsets = [0, 48], sizes = [10, 8], strides = [1, 1]} : vector<10x96xf32> to vector<10x8xf32>
    %228 = vector.extract_strided_slice %214 {offsets = [0, 56], sizes = [10, 8], strides = [1, 1]} : vector<10x96xf32> to vector<10x8xf32>
    %229 = vector.shape_cast %225 : vector<10x8xf32> to vector<1x10x8xf32>
    %230 = vector.shape_cast %226 : vector<10x8xf32> to vector<1x10x8xf32>
    %231 = vector.shape_cast %227 : vector<10x8xf32> to vector<1x10x8xf32>
    %232 = vector.shape_cast %228 : vector<10x8xf32> to vector<1x10x8xf32>
    %233 = tpu.concatenate %229, %230, %231, %232 in 0 : vector<1x10x8xf32>, vector<1x10x8xf32>, vector<1x10x8xf32>, vector<1x10x8xf32> -> vector<4x10x8xf32>
    %234 = arith.truncf %233 : vector<4x10x8xf32> to vector<4x10x8xbf16>
    %235 = vector.extract_strided_slice %214 {offsets = [0, 64], sizes = [10, 8], strides = [1, 1]} : vector<10x96xf32> to vector<10x8xf32>
    %236 = vector.extract_strided_slice %214 {offsets = [0, 72], sizes = [10, 8], strides = [1, 1]} : vector<10x96xf32> to vector<10x8xf32>
    %237 = vector.extract_strided_slice %214 {offsets = [0, 80], sizes = [10, 8], strides = [1, 1]} : vector<10x96xf32> to vector<10x8xf32>
    %238 = vector.extract_strided_slice %214 {offsets = [0, 88], sizes = [10, 8], strides = [1, 1]} : vector<10x96xf32> to vector<10x8xf32>
    %239 = vector.shape_cast %235 : vector<10x8xf32> to vector<1x10x8xf32>
    %240 = vector.shape_cast %236 : vector<10x8xf32> to vector<1x10x8xf32>
    %241 = vector.shape_cast %237 : vector<10x8xf32> to vector<1x10x8xf32>
    %242 = vector.shape_cast %238 : vector<10x8xf32> to vector<1x10x8xf32>
    %243 = tpu.concatenate %239, %240, %241, %242 in 0 : vector<1x10x8xf32>, vector<1x10x8xf32>, vector<1x10x8xf32>, vector<1x10x8xf32> -> vector<4x10x8xf32>
    %244 = arith.truncf %243 : vector<4x10x8xf32> to vector<4x10x8xbf16>
    "tpu.trace_start"() <{level = 10 : i32, message = "hqd,hkd->hqk"}> : () -> ()
    %cst_90 = arith.constant dense<0.000000e+00> : vector<4x10x10xf32>
    %245 = tpu.matmul %224, %234, %cst_90 {dimension_numbers = #tpu.dot_dimension_numbers<[2], [2], [1], [1], [0, 0, 0, 1, 1, 1], [0], [0]>} : vector<4x10x8xbf16>, vector<4x10x8xbf16>, vector<4x10x10xf32> -> vector<4x10x10xf32>
    "tpu.trace_stop"() : () -> ()
    %cst_91 = arith.constant 0.353553385 : f32
    %246 = vector.broadcast %cst_91 : f32 to vector<4x10x10xf32>
    %247 = arith.mulf %245, %246 : vector<4x10x10xf32>
    %248 = vector.shape_cast %29 : vector<10x10xf32> to vector<1x10x10xf32>
    %249 = vector.broadcast %248 : vector<1x10x10xf32> to vector<4x10x10xf32>
    %250 = arith.addf %247, %249 : vector<4x10x10xf32>
    %cst_92 = arith.constant dense<0xFF800000> : vector<4x10xf32>
    %251 = vector.multi_reduction <maximumf>, %250, %cst_92 [2] : vector<4x10x10xf32> to vector<4x10xf32>
    %252 = vector.shape_cast %251 : vector<4x10xf32> to vector<4x10x1xf32>
    %253 = vector.broadcast %252 : vector<4x10x1xf32> to vector<4x10x10xf32>
    %254 = arith.subf %250, %253 : vector<4x10x10xf32>
    %255 = math.exp %254 : vector<4x10x10xf32>
    %cst_93 = arith.constant dense<0.000000e+00> : vector<4x10xf32>
    %256 = vector.multi_reduction <add>, %255, %cst_93 [2] : vector<4x10x10xf32> to vector<4x10xf32>
    %257 = vector.shape_cast %256 : vector<4x10xf32> to vector<4x10x1xf32>
    %258 = tpu.reciprocal %257 {approx = true} : vector<4x10x1xf32> -> vector<4x10x1xf32>
    %259 = vector.broadcast %258 : vector<4x10x1xf32> to vector<4x10x10xf32>
    %260 = arith.mulf %255, %259 : vector<4x10x10xf32>
    %261 = arith.truncf %260 : vector<4x10x10xf32> to vector<4x10x10xbf16>
    "tpu.trace_start"() <{level = 10 : i32, message = "hqk,hkd->hqd"}> : () -> ()
    %cst_94 = arith.constant dense<0.000000e+00> : vector<4x10x8xf32>
    %262 = tpu.matmul %261, %244, %cst_94 {dimension_numbers = #tpu.dot_dimension_numbers<[2], [1], [1], [2], [0, 0, 0, 1, 1, 2], [0], [0]>} : vector<4x10x10xbf16>, vector<4x10x8xbf16>, vector<4x10x8xf32> -> vector<4x10x8xf32>
    "tpu.trace_stop"() : () -> ()
    %263 = vector.extract_strided_slice %262 {offsets = [0, 0, 0], sizes = [1, 10, 8], strides = [1, 1, 1]} : vector<4x10x8xf32> to vector<1x10x8xf32>
    %264 = vector.shape_cast %263 : vector<1x10x8xf32> to vector<10x8xf32>
    %265 = vector.extract_strided_slice %262 {offsets = [1, 0, 0], sizes = [1, 10, 8], strides = [1, 1, 1]} : vector<4x10x8xf32> to vector<1x10x8xf32>
    %266 = vector.shape_cast %265 : vector<1x10x8xf32> to vector<10x8xf32>
    %267 = vector.extract_strided_slice %262 {offsets = [2, 0, 0], sizes = [1, 10, 8], strides = [1, 1, 1]} : vector<4x10x8xf32> to vector<1x10x8xf32>
    %268 = vector.shape_cast %267 : vector<1x10x8xf32> to vector<10x8xf32>
    %269 = vector.extract_strided_slice %262 {offsets = [3, 0, 0], sizes = [1, 10, 8], strides = [1, 1, 1]} : vector<4x10x8xf32> to vector<1x10x8xf32>
    %270 = vector.shape_cast %269 : vector<1x10x8xf32> to vector<10x8xf32>
    %271 = tpu.concatenate %264, %266, %268, %270 in 1 : vector<10x8xf32>, vector<10x8xf32>, vector<10x8xf32>, vector<10x8xf32> -> vector<10x32xf32>
    %c1_95 = arith.constant 1 : index
    %c0_96 = arith.constant 0 : index
    %c0_97 = arith.constant 0 : index
    %272 = vector.load %arg10[%c1_95, %c0_96, %c0_97] : memref<2x32x32xbf16, #tpu.memory_space<vmem>>, vector<1x32x32xbf16>
    %273 = vector.shape_cast %272 : vector<1x32x32xbf16> to vector<32x32xbf16>
    %274 = arith.truncf %271 : vector<10x32xf32> to vector<10x32xbf16>
    %cst_98 = arith.constant dense<0.000000e+00> : vector<10x32xf32>
    %275 = tpu.matmul %274, %273, %cst_98 {dimension_numbers = #tpu.dot_dimension_numbers<[1], [0], [0], [1], [0, 0, 1, 1], [], []>} : vector<10x32xbf16>, vector<32x32xbf16>, vector<10x32xf32> -> vector<10x32xf32>
    %276 = arith.addf %180, %275 : vector<10x32xf32>
    %c1_99 = arith.constant 1 : index
    %c0_100 = arith.constant 0 : index
    %c0_101 = arith.constant 0 : index
    %277 = vector.load %arg11[%c1_99, %c0_100, %c0_101] : memref<2x1x32xf32, #tpu.memory_space<vmem>>, vector<1x1x32xf32>
    %278 = vector.shape_cast %277 : vector<1x1x32xf32> to vector<1x32xf32>
    %279 = vector.broadcast %278 : vector<1x32xf32> to vector<10x32xf32>
    %280 = arith.addf %276, %279 : vector<10x32xf32>
    %c1_102 = arith.constant 1 : index
    %c0_103 = arith.constant 0 : index
    %c0_104 = arith.constant 0 : index
    %281 = vector.load %arg12[%c1_102, %c0_103, %c0_104] : memref<2x1x32xf32, #tpu.memory_space<vmem>>, vector<1x1x32xf32>
    %282 = vector.shape_cast %281 : vector<1x1x32xf32> to vector<1x32xf32>
    %c1_105 = arith.constant 1 : index
    %c0_106 = arith.constant 0 : index
    %c0_107 = arith.constant 0 : index
    %283 = vector.load %arg13[%c1_105, %c0_106, %c0_107] : memref<2x1x32xf32, #tpu.memory_space<vmem>>, vector<1x1x32xf32>
    %284 = vector.shape_cast %283 : vector<1x1x32xf32> to vector<1x32xf32>
    %cst_108 = arith.constant dense<0.000000e+00> : vector<10xf32>
    %285 = vector.multi_reduction <add>, %280, %cst_108 [1] : vector<10x32xf32> to vector<10xf32>
    %286 = vector.shape_cast %285 : vector<10xf32> to vector<10x1xf32>
    %cst_109 = arith.constant 3.200000e+01 : f32
    %287 = vector.broadcast %cst_109 : f32 to vector<10x1xf32>
    %288 = arith.divf %286, %287 : vector<10x1xf32>
    %289 = vector.broadcast %288 : vector<10x1xf32> to vector<10x32xf32>
    %290 = arith.subf %280, %289 : vector<10x32xf32>
    %291 = arith.mulf %290, %290 : vector<10x32xf32>
    %cst_110 = arith.constant dense<0.000000e+00> : vector<10xf32>
    %292 = vector.multi_reduction <add>, %291, %cst_110 [1] : vector<10x32xf32> to vector<10xf32>
    %293 = vector.shape_cast %292 : vector<10xf32> to vector<10x1xf32>
    %cst_111 = arith.constant 3.200000e+01 : f32
    %294 = vector.broadcast %cst_111 : f32 to vector<10x1xf32>
    %295 = arith.divf %293, %294 : vector<10x1xf32>
    %296 = vector.broadcast %288 : vector<10x1xf32> to vector<10x32xf32>
    %297 = arith.subf %280, %296 : vector<10x32xf32>
    %cst_112 = arith.constant 9.99999974E-6 : f32
    %298 = vector.broadcast %cst_112 : f32 to vector<10x1xf32>
    %299 = arith.addf %295, %298 : vector<10x1xf32>
    %300 = math.rsqrt %299 : vector<10x1xf32>
    %301 = vector.broadcast %300 : vector<10x1xf32> to vector<10x32xf32>
    %302 = arith.mulf %297, %301 : vector<10x32xf32>
    %303 = vector.broadcast %282 : vector<1x32xf32> to vector<10x32xf32>
    %304 = arith.mulf %302, %303 : vector<10x32xf32>
    %305 = vector.broadcast %284 : vector<1x32xf32> to vector<10x32xf32>
    %306 = arith.addf %304, %305 : vector<10x32xf32>
    %c1_113 = arith.constant 1 : index
    %c0_114 = arith.constant 0 : index
    %c0_115 = arith.constant 0 : index
    %307 = vector.load %arg14[%c1_113, %c0_114, %c0_115] : memref<2x32x128xbf16, #tpu.memory_space<vmem>>, vector<1x32x128xbf16>
    %308 = vector.shape_cast %307 : vector<1x32x128xbf16> to vector<32x128xbf16>
    %309 = arith.truncf %306 : vector<10x32xf32> to vector<10x32xbf16>
    %cst_116 = arith.constant dense<0.000000e+00> : vector<10x128xf32>
    %310 = tpu.matmul %309, %308, %cst_116 {dimension_numbers = #tpu.dot_dimension_numbers<[1], [0], [0], [1], [0, 0, 1, 1], [], []>} : vector<10x32xbf16>, vector<32x128xbf16>, vector<10x128xf32> -> vector<10x128xf32>
    %c1_117 = arith.constant 1 : index
    %c0_118 = arith.constant 0 : index
    %c0_119 = arith.constant 0 : index
    %311 = vector.load %arg15[%c1_117, %c0_118, %c0_119] : memref<2x1x128xf32, #tpu.memory_space<vmem>>, vector<1x1x128xf32>
    %312 = vector.shape_cast %311 : vector<1x1x128xf32> to vector<1x128xf32>
    %313 = vector.broadcast %312 : vector<1x128xf32> to vector<10x128xf32>
    %314 = arith.addf %310, %313 : vector<10x128xf32>
    %cst_120 = arith.constant 1.702000e+00 : f32
    %315 = vector.broadcast %cst_120 : f32 to vector<10x128xf32>
    %316 = arith.mulf %315, %314 : vector<10x128xf32>
    %317 = arith.negf %316 : vector<10x128xf32>
    %318 = math.exp %317 : vector<10x128xf32>
    %cst_121 = arith.constant 1.000000e+00 : f32
    %319 = vector.broadcast %cst_121 : f32 to vector<10x128xf32>
    %320 = arith.addf %319, %318 : vector<10x128xf32>
    %321 = arith.divf %319, %320 : vector<10x128xf32>
    %322 = arith.mulf %314, %321 : vector<10x128xf32>
    %c1_122 = arith.constant 1 : index
    %c0_123 = arith.constant 0 : index
    %c0_124 = arith.constant 0 : index
    %323 = vector.load %arg16[%c1_122, %c0_123, %c0_124] : memref<2x128x32xbf16, #tpu.memory_space<vmem>>, vector<1x128x32xbf16>
    %324 = vector.shape_cast %323 : vector<1x128x32xbf16> to vector<128x32xbf16>
    %325 = arith.truncf %322 : vector<10x128xf32> to vector<10x128xbf16>
    %cst_125 = arith.constant dense<0.000000e+00> : vector<10x32xf32>
    %326 = tpu.matmul %325, %324, %cst_125 {dimension_numbers = #tpu.dot_dimension_numbers<[1], [0], [0], [1], [0, 0, 1, 1], [], []>} : vector<10x128xbf16>, vector<128x32xbf16>, vector<10x32xf32> -> vector<10x32xf32>
    %327 = arith.addf %280, %326 : vector<10x32xf32>
    %c1_126 = arith.constant 1 : index
    %c0_127 = arith.constant 0 : index
    %c0_128 = arith.constant 0 : index
    %328 = vector.load %arg17[%c1_126, %c0_127, %c0_128] : memref<2x1x32xf32, #tpu.memory_space<vmem>>, vector<1x1x32xf32>
    %329 = vector.shape_cast %328 : vector<1x1x32xf32> to vector<1x32xf32>
    %330 = vector.broadcast %329 : vector<1x32xf32> to vector<10x32xf32>
    %331 = arith.addf %327, %330 : vector<10x32xf32>
    %332 = vector.extract_strided_slice %331 {offsets = [0, 0], sizes = [1, 32], strides = [1, 1]} : vector<10x32xf32> to vector<1x32xf32>
    %333 = vector.extract_strided_slice %331 {offsets = [5, 0], sizes = [1, 32], strides = [1, 1]} : vector<10x32xf32> to vector<1x32xf32>
    %334 = tpu.concatenate %332, %333 in 0 : vector<1x32xf32>, vector<1x32xf32> -> vector<2x32xf32>
    %c0_129 = arith.constant 0 : index
    %c0_130 = arith.constant 0 : index
    %335 = vector.load %arg18[%c0_129, %c0_130] : memref<1x32xf32, #tpu.memory_space<vmem>>, vector<1x32xf32>
    %c0_131 = arith.constant 0 : index
    %c0_132 = arith.constant 0 : index
    %336 = vector.load %arg19[%c0_131, %c0_132] : memref<1x32xf32, #tpu.memory_space<vmem>>, vector<1x32xf32>
    %cst_133 = arith.constant dense<0.000000e+00> : vector<2xf32>
    %337 = vector.multi_reduction <add>, %334, %cst_133 [1] : vector<2x32xf32> to vector<2xf32>
    %338 = vector.shape_cast %337 : vector<2xf32> to vector<2x1xf32>
    %cst_134 = arith.constant 3.200000e+01 : f32
    %339 = vector.broadcast %cst_134 : f32 to vector<2x1xf32>
    %340 = arith.divf %338, %339 : vector<2x1xf32>
    %341 = vector.broadcast %340 : vector<2x1xf32> to vector<2x32xf32>
    %342 = arith.subf %334, %341 : vector<2x32xf32>
    %343 = arith.mulf %342, %342 : vector<2x32xf32>
    %cst_135 = arith.constant dense<0.000000e+00> : vector<2xf32>
    %344 = vector.multi_reduction <add>, %343, %cst_135 [1] : vector<2x32xf32> to vector<2xf32>
    %345 = vector.shape_cast %344 : vector<2xf32> to vector<2x1xf32>
    %cst_136 = arith.constant 3.200000e+01 : f32
    %346 = vector.broadcast %cst_136 : f32 to vector<2x1xf32>
    %347 = arith.divf %345, %346 : vector<2x1xf32>
    %348 = vector.broadcast %340 : vector<2x1xf32> to vector<2x32xf32>
    %349 = arith.subf %334, %348 : vector<2x32xf32>
    %cst_137 = arith.constant 9.99999974E-6 : f32
    %350 = vector.broadcast %cst_137 : f32 to vector<2x1xf32>
    %351 = arith.addf %347, %350 : vector<2x1xf32>
    %352 = math.rsqrt %351 : vector<2x1xf32>
    %353 = vector.broadcast %352 : vector<2x1xf32> to vector<2x32xf32>
    %354 = arith.mulf %349, %353 : vector<2x32xf32>
    %355 = vector.broadcast %335 : vector<1x32xf32> to vector<2x32xf32>
    %356 = arith.mulf %354, %355 : vector<2x32xf32>
    %357 = vector.broadcast %336 : vector<1x32xf32> to vector<2x32xf32>
    %358 = arith.addf %356, %357 : vector<2x32xf32>
    %359 = arith.truncf %358 : vector<2x32xf32> to vector<2x32xbf16>
    %c0_138 = arith.constant 0 : index
    %c0_139 = arith.constant 0 : index
    %360 = vector.load %arg20[%c0_138, %c0_139] : memref<32x16xbf16, #tpu.memory_space<vmem>>, vector<32x16xbf16>
    %cst_140 = arith.constant dense<0.000000e+00> : vector<2x16xf32>
    %361 = tpu.matmul %359, %360, %cst_140 {dimension_numbers = #tpu.dot_dimension_numbers<[1], [0], [0], [1], [0, 0, 1, 1], [], []>} : vector<2x32xbf16>, vector<32x16xbf16>, vector<2x16xf32> -> vector<2x16xf32>
    %c0_141 = arith.constant 0 : index
    %c0_142 = arith.constant 0 : index
    %362 = vector.load %arg21[%c0_141, %c0_142] : memref<2x16xf32, #tpu.memory_space<vmem>>, vector<2x16xf32>
    tpu.vector_store %arg21[%c0_141, %c0_142], %361 {strides = array<i32>} : memref<2x16xf32, #tpu.memory_space<vmem>>, vector<2x16xf32>,
    return
  }
}

</mosaic_0001>

<llo_original>
// kernel: clip_encode_image.1
$region0: #{clip_encode_image.1}
  #allocation0 [shape = 'u32[]', space=smem, size = 0x4, offset = 0x4, fixed_abs, tag = 'smem constant byte address 0x4 - core index']
  #allocation1 [shape = 'u32[144,128]{1,0:T(1,128)}', space=vmem, size = 0x12000, scoped, tag = 'internal scratch']
  %s0 = inlined_call_operand.vmem [shape: bf16[10,192], index: 0, kind: input, shape index: {}]
  %s1 = inlined_call_operand.vmem [shape: f32[10,32], index: 1, kind: input, shape index: {}]
  %s2 = inlined_call_operand.vmem [shape: f32[10,10], index: 2, kind: input, shape index: {}]
  %s3 = inlined_call_operand.vmem [shape: bf16[192,32], index: 3, kind: input, shape index: {}]
  %s4 = inlined_call_operand.vmem [shape: f32[1,32], index: 4, kind: input, shape index: {}]
  %s5 = inlined_call_operand.vmem [shape: f32[1,32], index: 5, kind: input, shape index: {}]
  %s6 = inlined_call_operand.vmem [shape: f32[2,1,32], index: 6, kind: input, shape index: {}]
  %s7 = inlined_call_operand.vmem [shape: f32[2,1,32], index: 7, kind: input, shape index: {}]
  %s8 = inlined_call_operand.vmem [shape: bf16[2,32,96], index: 8, kind: input, shape index: {}]
  %s9 = inlined_call_operand.vmem [shape: f32[2,1,96], index: 9, kind: input, shape index: {}]
  %s10 = inlined_call_operand.vmem [shape: bf16[2,32,32], index: 10, kind: input, shape index: {}]
  %s11 = inlined_call_operand.vmem [shape: f32[2,1,32], index: 11, kind: input, shape index: {}]
  %s12 = inlined_call_operand.vmem [shape: f32[2,1,32], index: 12, kind: input, shape index: {}]
  %s13 = inlined_call_operand.vmem [shape: f32[2,1,32], index: 13, kind: input, shape index: {}]
  %s14 = inlined_call_operand.vmem [shape: bf16[2,32,128], index: 14, kind: input, shape index: {}]
  %s15 = inlined_call_operand.vmem [shape: f32[2,1,128], index: 15, kind: input, shape index: {}]
  %s16 = inlined_call_operand.vmem [shape: bf16[2,128,32], index: 16, kind: input, shape index: {}]
  %s17 = inlined_call_operand.vmem [shape: f32[2,1,32], index: 17, kind: input, shape index: {}]
  %s18 = inlined_call_operand.vmem [shape: f32[1,32], index: 18, kind: input, shape index: {}]
  %s19 = inlined_call_operand.vmem [shape: f32[1,32], index: 19, kind: input, shape index: {}]
  %s20 = inlined_call_operand.vmem [shape: bf16[32,16], index: 20, kind: input, shape index: {}]
  %s21 = inlined_call_operand.hbm [shape: f32[2,16], index: 21, kind: output, shape index: {}]
  %s22 = sld [smem:[#allocation0]]
  $region94: #{clip_encode_image.1} parent=0
    _
  %s24 = ssub.s32 1, %s22
  %s25 = scalar_select 0, %s24, %s22
  $region1: #{clip_encode_image.1} parent=0
    #allocation2 [shape = 'u8[1024]{0}', space=vmem, size = 0x400, scoped, tag = 'output window, operand 0, single buffered']
    #allocation3 [shape = 's32[1]{0}', space=sflag, size = 0x4, scoped, tag = 'scoped memory for clip_encode_image.1']
    %26 = vsyncpa [#allocation3], 0
    // Predicated region
    $region2: #{clip_encode_image.1} parent=1 // pred_check
      _
    $region3: #{clip_encode_image.1} parent=1 // pred_check_branch
      %28 = sbr.rel (0) target = $region5
    $region4: #{clip_encode_image.1} parent=1 // pred_region
      _
    $region5: #{clip_encode_image.1} parent=1 // pred_fallthru
      _
    // Predicated region
    $region6: #{clip_encode_image.1} parent=1 // pred_check
      _
    $region7: #{clip_encode_image.1} parent=1 // pred_check_branch
      %30 = sbr.rel (0) target = $region9
    $region8: #{clip_encode_image.1} parent=1 // pred_region
      _
    $region9: #{clip_encode_image.1} parent=1 // pred_fallthru
      _
    // Predicated region
    $region10: #{clip_encode_image.1} parent=1 // pred_check
      _
    $region11: #{clip_encode_image.1} parent=1 // pred_check_branch
      %32 = sbr.rel (0) target = $region13
    $region12: #{clip_encode_image.1} parent=1 // pred_region
      _
    $region13: #{clip_encode_image.1} parent=1 // pred_fallthru
      _
    // Predicated region
    $region14: #{clip_encode_image.1} parent=1 // pred_check
      _
    $region15: #{clip_encode_image.1} parent=1 // pred_check_branch
      %34 = sbr.rel (0) target = $region17
    $region16: #{clip_encode_image.1} parent=1 // pred_region
      _
    $region17: #{clip_encode_image.1} parent=1 // pred_fallthru
      _
    // Predicated region
    $region18: #{clip_encode_image.1} parent=1 // pred_check
      _
    $region19: #{clip_encode_image.1} parent=1 // pred_check_branch
      %36 = sbr.rel (0) target = $region21
    $region20: #{clip_encode_image.1} parent=1 // pred_region
      _
    $region21: #{clip_encode_image.1} parent=1 // pred_fallthru
      _
    // Predicated region
    $region22: #{clip_encode_image.1} parent=1 // pred_check
      _
    $region23: #{clip_encode_image.1} parent=1 // pred_check_branch
      %38 = sbr.rel (0) target = $region25
    $region24: #{clip_encode_image.1} parent=1 // pred_region
      _
    $region25: #{clip_encode_image.1} parent=1 // pred_fallthru
      _
    // Predicated region
    $region26: #{clip_encode_image.1} parent=1 // pred_check
      _
    $region27: #{clip_encode_image.1} parent=1 // pred_check_branch
      %40 = sbr.rel (0) target = $region29
    $region28: #{clip_encode_image.1} parent=1 // pred_region
      _
    $region29: #{clip_encode_image.1} parent=1 // pred_fallthru
      _
    // Predicated region
    $region30: #{clip_encode_image.1} parent=1 // pred_check
      _
    $region31: #{clip_encode_image.1} parent=1 // pred_check_branch
      %42 = sbr.rel (0) target = $region33
    $region32: #{clip_encode_image.1} parent=1 // pred_region
      _
    $region33: #{clip_encode_image.1} parent=1 // pred_fallthru
      _
    // Predicated region
    $region34: #{clip_encode_image.1} parent=1 // pred_check
      _
    $region35: #{clip_encode_image.1} parent=1 // pred_check_branch
      %44 = sbr.rel (0) target = $region37
    $region36: #{clip_encode_image.1} parent=1 // pred_region
      _
    $region37: #{clip_encode_image.1} parent=1 // pred_fallthru
      _
    // Predicated region
    $region38: #{clip_encode_image.1} parent=1 // pred_check
      _
    $region39: #{clip_encode_image.1} parent=1 // pred_check_branch
      %46 = sbr.rel (0) target = $region41
    $region40: #{clip_encode_image.1} parent=1 // pred_region
      _
    $region41: #{clip_encode_image.1} parent=1 // pred_fallthru
      _
    // Predicated region
    $region42: #{clip_encode_image.1} parent=1 // pred_check
      _
    $region43: #{clip_encode_image.1} parent=1 // pred_check_branch
      %48 = sbr.rel (0) target = $region45
    $region44: #{clip_encode_image.1} parent=1 // pred_region
      _
    $region45: #{clip_encode_image.1} parent=1 // pred_fallthru
      _
    // Predicated region
    $region46: #{clip_encode_image.1} parent=1 // pred_check
      _
    $region47: #{clip_encode_image.1} parent=1 // pred_check_branch
      %50 = sbr.rel (0) target = $region49
    $region48: #{clip_encode_image.1} parent=1 // pred_region
      _
    $region49: #{clip_encode_image.1} parent=1 // pred_fallthru
      _
    // Predicated region
    $region50: #{clip_encode_image.1} parent=1 // pred_check
      _
    $region51: #{clip_encode_image.1} parent=1 // pred_check_branch
      %52 = sbr.rel (0) target = $region53
    $region52: #{clip_encode_image.1} parent=1 // pred_region
      _
    $region53: #{clip_encode_image.1} parent=1 // pred_fallthru
      _
    // Predicated region
    $region54: #{clip_encode_image.1} parent=1 // pred_check
      _
    $region55: #{clip_encode_image.1} parent=1 // pred_check_branch
      %54 = sbr.rel (0) target = $region57
    $region56: #{clip_encode_image.1} parent=1 // pred_region
      _
    $region57: #{clip_encode_image.1} parent=1 // pred_fallthru
      _
    // Predicated region
    $region58: #{clip_encode_image.1} parent=1 // pred_check
      _
    $region59: #{clip_encode_image.1} parent=1 // pred_check_branch
      %56 = sbr.rel (0) target = $region61
    $region60: #{clip_encode_image.1} parent=1 // pred_region
      _
    $region61: #{clip_encode_image.1} parent=1 // pred_fallthru
      _
    // Predicated region
    $region62: #{clip_encode_image.1} parent=1 // pred_check
      _
    $region63: #{clip_encode_image.1} parent=1 // pred_check_branch
      %58 = sbr.rel (0) target = $region65
    $region64: #{clip_encode_image.1} parent=1 // pred_region
      _
    $region65: #{clip_encode_image.1} parent=1 // pred_fallthru
      _
    // Predicated region
    $region66: #{clip_encode_image.1} parent=1 // pred_check
      _
    $region67: #{clip_encode_image.1} parent=1 // pred_check_branch
      %60 = sbr.rel (0) target = $region69
    $region68: #{clip_encode_image.1} parent=1 // pred_region
      _
    $region69: #{clip_encode_image.1} parent=1 // pred_fallthru
      _
    // Predicated region
    $region70: #{clip_encode_image.1} parent=1 // pred_check
      _
    $region71: #{clip_encode_image.1} parent=1 // pred_check_branch
      %62 = sbr.rel (0) target = $region73
    $region72: #{clip_encode_image.1} parent=1 // pred_region
      _
    $region73: #{clip_encode_image.1} parent=1 // pred_fallthru
      _
    // Predicated region
    $region74: #{clip_encode_image.1} parent=1 // pred_check
      _
    $region75: #{clip_encode_image.1} parent=1 // pred_check_branch
      %64 = sbr.rel (0) target = $region77
    $region76: #{clip_encode_image.1} parent=1 // pred_region
      _
    $region77: #{clip_encode_image.1} parent=1 // pred_fallthru
      _
    // Predicated region
    $region78: #{clip_encode_image.1} parent=1 // pred_check
      _
    $region79: #{clip_encode_image.1} parent=1 // pred_check_branch
      %66 = sbr.rel (0) target = $region81
    $region80: #{clip_encode_image.1} parent=1 // pred_region
      _
    $region81: #{clip_encode_image.1} parent=1 // pred_fallthru
      _
    // Predicated region
    $region82: #{clip_encode_image.1} parent=1 // pred_check
      _
    $region83: #{clip_encode_image.1} parent=1 // pred_check_branch
      %68 = sbr.rel (0) target = $region85
    $region84: #{clip_encode_image.1} parent=1 // pred_region
      _
    $region85: #{clip_encode_image.1} parent=1 // pred_fallthru
      _
    %v70 = vld [vmem:[%s0] sm:$0xff]
    %v71 = vld [vmem:[%s0 + $0x8] sm:$0x11]
    %v72 = vld [vmem:[%s3] sm:$0xf]
    %v73 = vld [vmem:[%s3 + $0x4] sm:$0xf]
    %v74 = vld [vmem:[%s3 + $0x8] sm:$0xf]
    %v75 = vld [vmem:[%s3 + $0xc] sm:$0xf]
    %v76 = vld [vmem:[%s3 + $0x10] sm:$0xf]
    %v77 = vld [vmem:[%s3 + $0x14] sm:$0xf]
    %v78 = vld [vmem:[%s3 + $0x18] sm:$0xf]
    %v79 = vld [vmem:[%s3 + $0x1c] sm:$0xf]
    %v80 = vld [vmem:[%s3 + $0x20] sm:$0xf]
    %v81 = vld [vmem:[%s3 + $0x24] sm:$0xf]
    %v82 = vld [vmem:[%s3 + $0x28] sm:$0xf]
    %v83 = vld [vmem:[%s3 + $0x2c] sm:$0xf]
    %v84 = vld [vmem:[%s3 + $0x30] sm:$0xf]
    %v85 = vld [vmem:[%s3 + $0x34] sm:$0xf]
    %v86 = vld [vmem:[%s3 + $0x38] sm:$0xf]
    %v87 = vld [vmem:[%s3 + $0x3c] sm:$0xf]
    %v88 = vld [vmem:[%s3 + $0x40] sm:$0xf]
    %v89 = vld [vmem:[%s3 + $0x44] sm:$0xf]
    %v90 = vld [vmem:[%s3 + $0x48] sm:$0xf]
    %v91 = vld [vmem:[%s3 + $0x4c] sm:$0xf]
    %v92 = vld [vmem:[%s3 + $0x50] sm:$0xf]
    %v93 = vld [vmem:[%s3 + $0x54] sm:$0xf]
    %v94 = vld [vmem:[%s3 + $0x58] sm:$0xf]
    %v95 = vld [vmem:[%s3 + $0x5c] sm:$0xf]
    %v96 = vld [vmem:[%s1] sm:$0xff]
    %v97 = vld [vmem:[%s1 + $0x8] sm:$0x3]
    %v100 = vunpack.c.l.b16 %v70
    %v101 = vunpack.c.h.b16 %v70
    %v102 = vunpack.c.l.b16 %v71
    %v103 = vunpack.c.h.b16 %v71
    %v104 = vpack.c.b16 %v102, %v100
    %v105 = vpack.c.b16 %v103, %v101
    %v131 = vunpack.c.l.b16 %v72
    %v132 = vunpack.c.l.b16 %v73
    %v133 = vunpack.c.l.b16 %v74
    %v134 = vunpack.c.l.b16 %v75
    %v135 = vunpack.c.l.b16 %v76
    %v136 = vunpack.c.l.b16 %v77
    %v137 = vunpack.c.l.b16 %v78
    %v138 = vunpack.c.l.b16 %v79
    %v139 = vunpack.c.l.b16 %v80
    %v140 = vunpack.c.l.b16 %v81
    %v141 = vunpack.c.l.b16 %v82
    %v142 = vunpack.c.l.b16 %v83
    %v143 = vunpack.c.l.b16 %v84
    %v144 = vunpack.c.l.b16 %v85
    %v145 = vunpack.c.l.b16 %v86
    %v146 = vunpack.c.l.b16 %v87
    %v147 = vunpack.c.l.b16 %v88
    %v148 = vunpack.c.l.b16 %v89
    %v149 = vunpack.c.l.b16 %v90
    %v150 = vunpack.c.l.b16 %v91
    %v151 = vunpack.c.l.b16 %v92
    %v152 = vunpack.c.l.b16 %v93
    %v153 = vunpack.c.l.b16 %v94
    %v154 = vunpack.c.l.b16 %v95
    %v155 = vpack.c.b16 %v132, %v131
    %v156 = vpack.c.b16 %v134, %v133
    %v157 = vpack.c.b16 %v136, %v135
    %v158 = vpack.c.b16 %v138, %v137
    %v159 = vpack.c.b16 %v140, %v139
    %v160 = vpack.c.b16 %v142, %v141
    %v161 = vpack.c.b16 %v144, %v143
    %v162 = vpack.c.b16 %v146, %v145
    %v163 = vpack.c.b16 %v148, %v147
    %v164 = vpack.c.b16 %v150, %v149
    %v165 = vpack.c.b16 %v152, %v151
    %v166 = vpack.c.b16 %v154, %v153
    %vm179 = vcmask 523264
    %v181 = vsel %vm179, %v105, 0
    %183 = vmatprep.subr.bf16.mxu0 0
    %184 = vmatpush1.bf16.msra.mxu0 %v155
    %185 = vmatprep.subr.bf16.mxu0 0
    %186 = vmatpush1.bf16.msra.mxu0 %v156
    %187 = vmatprep.subr.bf16.mxu0 0
    %188 = vmatpush1.bf16.msra.mxu0 %v157
    %189 = vmatprep.subr.bf16.mxu0 0
    %190 = vmatpush1.bf16.msra.mxu0 %v158
    %191 = vmatprep.subr.bf16.mxu0 0
    %192 = vmatpush1.bf16.msra.mxu0 %v159
    %193 = vmatprep.subr.bf16.mxu0 0
    %194 = vmatpush1.bf16.msra.mxu0 %v160
    %195 = vmatprep.subr.bf16.mxu0 0
    %196 = vmatpush1.bf16.msra.mxu0 %v161
    %197 = vmatprep.subr.bf16.mxu0 0
    %198 = vmatpush1.bf16.msra.mxu0 %v162
    %199 = vmatprep.subr.bf16.mxu0 0
    %200 = vmatpush1.bf16.msra.mxu0 %v163
    %201 = vmatprep.subr.bf16.mxu0 0
    %202 = vmatpush1.bf16.msra.mxu0 %v164
    %203 = vmatprep.subr.bf16.mxu0 0
    %204 = vmatpush1.bf16.msra.mxu0 %v165
    %205 = vmatprep.subr.bf16.mxu0 0
    %206 = vmatpush1.bf16.msra.mxu0 %v166
    %207 = vmatprep.subr.bf16.mxu0 0
    %208 = vmatpush1.bf16.msra.mxu0 0
    %209 = vmatprep.subr.bf16.mxu0 0
    %210 = vmatpush1.bf16.msra.mxu0 0
    %211 = vmatprep.subr.bf16.mxu0 0
    %212 = vmatpush1.bf16.msra.mxu0 0
    %213 = vmatprep.subr.bf16.mxu0 0
    %214 = vmatpush1.bf16.msra.mxu0 0
    %215 = vmatprep.mubr.bf16.mxu0 %v181
    %216 = vmatmul.mubr.bf16.gmra.mrb[0].mxu0 %v104
    %v217 = vpop.f32.mrb[0].mxu0
    %v218 = vadd.f32 %v96, %v217
    %v219 = vpop.f32.mrb[0].mxu0
    %v220 = vpop.f32.mrb[0].mxu0
    %v221 = vadd.f32 %v97, %v220
    %v222 = vpop.f32.mrb[0].mxu0
    %223 = vdwg.mxu0
    %v224 = vld [vmem:[%s4] sm:$0x1]
    %v225 = vld [vmem:[%s5] sm:$0x1]
    %vm226 = vcmask 261120
    %v227 = vsel %vm226, %v218, 0.0
    %228 = vadd.xlane.f32.xlu0 %v227
    %v229 = vpop.xlane.xlu0 %228
    %vm230 = vcmask 254976
    %v231 = vsel %vm230, %v221, 0.0
    %232 = vadd.xlane.f32.xlu0 %v231
    %v233 = vpop.xlane.xlu0 %232
    %v234 = vrcp.pop 32.0
    %v235 = vmul.f32 %v229, %v234
    %v236 = vmul.f32 %v233, %v234
    %v237 = vsub.f32 %v218, %v235
    %v238 = vsub.f32 %v221, %v236
    %v239 = vmul.f32 %v237, %v237
    %v240 = vmul.f32 %v238, %v238
    %v241 = vsel %vm226, %v239, 0.0
    %242 = vadd.xlane.f32.xlu0 %v241
    %v243 = vpop.xlane.xlu0 %242
    %v244 = vsel %vm230, %v240, 0.0
    %245 = vadd.xlane.f32.xlu0 %v244
    %v246 = vpop.xlane.xlu0 %245
    %v247 = vmul.f32 %v243, %v234
    %v248 = vmul.f32 %v246, %v234
    %v249 = vadd.f32 %v247, 1e-05
    %v250 = vadd.f32 %v248, 1e-05
    %v251 = vrsqrt.pop %v249
    %v252 = vrsqrt.pop %v250
    %v253 = vmul.f32 %v237, %v251
    %v254 = vmul.f32 %v238, %v252
    %v256 = vlaneseq
    %v257 = vshrl.u32 %v256, 7
    %v258 = vsub.s32 0, %v257
    %v259 = vrot.slane %v224, %v258
    %v261 = vmul.f32 %v253, %v259
    %v262 = vmul.f32 %v254, %v259
    %v264 = vlaneseq
    %v265 = vshrl.u32 %v264, 7
    %v266 = vsub.s32 0, %v265
    %v267 = vrot.slane %v225, %v266
    %v269 = vadd.f32 %v261, %v267
    %v270 = vadd.f32 %v262, %v267
    %v271 = vld [vmem:[%s2] sm:$0xff]
    %v272 = vld [vmem:[%s2 + $0x8] sm:$0x3]
    %v273 = vld [vmem:[%s6] sm:$0x1]
    %v274 = vld [vmem:[%s7] sm:$0x1]
    %v275 = vsel %vm226, %v269, 0.0
    %276 = vadd.xlane.f32.xlu0 %v275
    %v277 = vpop.xlane.xlu0 %276
    %v278 = vsel %vm230, %v270, 0.0
    %279 = vadd.xlane.f32.xlu0 %v278
    %v280 = vpop.xlane.xlu0 %279
    %v281 = vmul.f32 %v277, %v234
    %v282 = vmul.f32 %v280, %v234
    %v283 = vsub.f32 %v269, %v281
    %v284 = vsub.f32 %v270, %v282
    %v285 = vmul.f32 %v283, %v283
    %v286 = vmul.f32 %v284, %v284
    %v287 = vsel %vm226, %v285, 0.0
    %288 = vadd.xlane.f32.xlu0 %v287
    %v289 = vpop.xlane.xlu0 %288
    %v290 = vsel %vm230, %v286, 0.0
    %291 = vadd.xlane.f32.xlu0 %v290
    %v292 = vpop.xlane.xlu0 %291
    %v293 = vmul.f32 %v289, %v234
    %v294 = vmul.f32 %v292, %v234
    %v295 = vadd.f32 %v293, 1e-05
    %v296 = vadd.f32 %v294, 1e-05
    %v297 = vrsqrt.pop %v295
    %v298 = vrsqrt.pop %v296
    %v299 = vmul.f32 %v283, %v297
    %v300 = vmul.f32 %v284, %v298
    %v302 = vlaneseq
    %v303 = vshrl.u32 %v302, 7
    %v304 = vsub.s32 0, %v303
    %v305 = vrot.slane %v273, %v304
    %v307 = vmul.f32 %v299, %v305
    %v308 = vmul.f32 %v300, %v305
    %v310 = vlaneseq
    %v311 = vshrl.u32 %v310, 7
    %v312 = vsub.s32 0, %v311
    %v313 = vrot.slane %v274, %v312
    %v315 = vadd.f32 %v307, %v313
    %v316 = vadd.f32 %v308, %v313
    %v317 = vld [vmem:[%s8] sm:$0xf]
    %v318 = vld [vmem:[%s8 + $0x4] sm:$0xf]
    %v319 = vld [vmem:[%s8 + $0x8] sm:$0xf]
    %v320 = vld [vmem:[%s8 + $0xc] sm:$0xf]
    %v321 = vpack.c.bf16 %v316, %v315
    %v322 = vld [vmem:[%s9] sm:$0x1]
    %v324 = vlaneseq
    %v325 = vshrl.u32 %v324, 7
    %v326 = vsub.s32 0, %v325
    %v327 = vrot.slane %v322, %v326
    %v333 = vunpack.c.l.b16 %v317
    %v334 = vunpack.c.l.b16 %v318
    %v335 = vunpack.c.l.b16 %v319
    %v336 = vunpack.c.l.b16 %v320
    %v337 = vpack.c.b16 %v334, %v333
    %v338 = vpack.c.b16 %v336, %v335
    %v342 = vsel %vm226, %v321, 0
    %344 = vmatprep.subr.bf16.mxu0 0
    %345 = vmatpush1.bf16.msra.mxu0 %v337
    %346 = vmatprep.subr.bf16.mxu0 0
    %347 = vmatpush1.bf16.msra.mxu0 %v338
    %348 = vmatprep.subr.bf16.mxu0 0
    %349 = vmatpush1.bf16.msra.mxu0 0
    %350 = vmatprep.subr.bf16.mxu0 0
    %351 = vmatpush1.bf16.msra.mxu0 0
    %352 = vmatprep.subr.bf16.mxu0 0
    %353 = vmatpush1.bf16.msra.mxu0 0
    %354 = vmatprep.subr.bf16.mxu0 0
    %355 = vmatpush1.bf16.msra.mxu0 0
    %356 = vmatprep.subr.bf16.mxu0 0
    %357 = vmatpush1.bf16.msra.mxu0 0
    %358 = vmatprep.subr.bf16.mxu0 0
    %359 = vmatpush1.bf16.msra.mxu0 0
    %360 = vmatprep.subr.bf16.mxu0 0
    %361 = vmatpush1.bf16.msra.mxu0 0
    %362 = vmatprep.subr.bf16.mxu0 0
    %363 = vmatpush1.bf16.msra.mxu0 0
    %364 = vmatprep.subr.bf16.mxu0 0
    %365 = vmatpush1.bf16.msra.mxu0 0
    %366 = vmatprep.subr.bf16.mxu0 0
    %367 = vmatpush1.bf16.msra.mxu0 0
    %368 = vmatprep.subr.bf16.mxu0 0
    %369 = vmatpush1.bf16.msra.mxu0 0
    %370 = vmatprep.subr.bf16.mxu0 0
    %371 = vmatpush1.bf16.msra.mxu0 0
    %372 = vmatprep.subr.bf16.mxu0 0
    %373 = vmatpush1.bf16.msra.mxu0 0
    %374 = vmatprep.subr.bf16.mxu0 0
    %375 = vmatpush1.bf16.msra.mxu0 0
    %376 = vmatprep.mubr.bf16.mxu0 0
    %377 = vmatmul.mubr.bf16.gmra.mrb[0].mxu0 %v342
    %v378 = vpop.f32.mrb[0].mxu0
    %v379 = vadd.f32 %v327, %v378
    %v380 = vpop.f32.mrb[0].mxu0
    %v381 = vpop.f32.mrb[0].mxu0
    %v382 = vadd.f32 %v327, %v381
    %v383 = vpop.f32.mrb[0].mxu0
    %384 = vdwg.mxu0
    %387 = vrot.lane.b32.xlu0 %v379, 120
    %v388 = vpop.permute.xlu0 %387
    %389 = vrot.lane.b32.xlu0 %v382, 120
    %v390 = vpop.permute.xlu0 %389
    %393 = vrot.lane.b32.xlu0 %v379, 112
    %v394 = vpop.permute.xlu0 %393
    %395 = vrot.lane.b32.xlu0 %v382, 112
    %v396 = vpop.permute.xlu0 %395
    %399 = vrot.lane.b32.xlu0 %v379, 104
    %v400 = vpop.permute.xlu0 %399
    %401 = vrot.lane.b32.xlu0 %v382, 104
    %v402 = vpop.permute.xlu0 %401
    %v405 = vpack.c.bf16 %v382, %v379
    %v406 = vpack.c.bf16 %v390, %v388
    %v407 = vpack.c.bf16 %v396, %v394
    %v408 = vpack.c.bf16 %v402, %v400
    %410 = vrot.lane.b32.xlu0 %v405, 96
    %v411 = vpop.permute.xlu0 %410
    %vm412 = vcmask 64512
    %v414 = vsel %vm412, %v405, 0
    %v417 = vsel %vm412, %v411, 0
    %419 = vmatprep.subr.bf16.mxu0 0
    %420 = vmatpush1.bf16.xpose.msra.mxu0 %v417
    %421 = vmatprep.subr.bf16.mxu0 0
    %422 = vmatpush1.bf16.xpose.msra.mxu0 0
    %423 = vmatprep.subr.bf16.mxu0 0
    %424 = vmatpush1.bf16.xpose.msra.mxu0 0
    %425 = vmatprep.subr.bf16.mxu0 0
    %426 = vmatpush1.bf16.xpose.msra.mxu0 0
    %427 = vmatprep.subr.bf16.mxu0 0
    %428 = vmatpush1.bf16.xpose.msra.mxu0 0
    %429 = vmatprep.subr.bf16.mxu0 0
    %430 = vmatpush1.bf16.xpose.msra.mxu0 0
    %431 = vmatprep.subr.bf16.mxu0 0
    %432 = vmatpush1.bf16.xpose.msra.mxu0 0
    %433 = vmatprep.subr.bf16.mxu0 0
    %434 = vmatpush1.bf16.xpose.msra.mxu0 0
    %435 = vmatprep.subr.bf16.mxu0 0
    %436 = vmatpush1.bf16.xpose.msra.mxu0 0
    %437 = vmatprep.subr.bf16.mxu0 0
    %438 = vmatpush1.bf16.xpose.msra.mxu0 0
    %439 = vmatprep.subr.bf16.mxu0 0
    %440 = vmatpush1.bf16.xpose.msra.mxu0 0
    %441 = vmatprep.subr.bf16.mxu0 0
    %442 = vmatpush1.bf16.xpose.msra.mxu0 0
    %443 = vmatprep.subr.bf16.mxu0 0
    %444 = vmatpush1.bf16.xpose.msra.mxu0 0
    %445 = vmatprep.subr.bf16.mxu0 0
    %446 = vmatpush1.bf16.xpose.msra.mxu0 0
    %447 = vmatprep.subr.bf16.mxu0 0
    %448 = vmatpush1.bf16.xpose.msra.mxu0 0
    %449 = vmatprep.subr.bf16.mxu0 0
    %450 = vmatpush1.bf16.xpose.msra.mxu0 0
    %451 = vmatprep.mubr.bf16.mxu0 0
    %452 = vmatmul.mubr.bf16.gmra.mrb[0].mxu0 %v414
    %v453 = vpop.f32.mrb[0].mxu0
    %v454 = vadd.f32 0.0, %v453
    %v455 = vpop.f32.mrb[0].mxu0
    %v456 = vpop.f32.mrb[0].mxu0
    %v457 = vadd.f32 0.0, %v456
    %v458 = vpop.f32.mrb[0].mxu0
    %459 = vdwg.mxu0
    %461 = vrot.lane.b32.xlu0 %v406, 96
    %v462 = vpop.permute.xlu0 %461
    %v464 = vsel %vm412, %v406, 0
    %v467 = vsel %vm412, %v462, 0
    %469 = vmatprep.subr.bf16.mxu0 0
    %470 = vmatpush1.bf16.xpose.msra.mxu0 %v467
    %471 = vmatprep.subr.bf16.mxu0 0
    %472 = vmatpush1.bf16.xpose.msra.mxu0 0
    %473 = vmatprep.subr.bf16.mxu0 0
    %474 = vmatpush1.bf16.xpose.msra.mxu0 0
    %475 = vmatprep.subr.bf16.mxu0 0
    %476 = vmatpush1.bf16.xpose.msra.mxu0 0
    %477 = vmatprep.subr.bf16.mxu0 0
    %478 = vmatpush1.bf16.xpose.msra.mxu0 0
    %479 = vmatprep.subr.bf16.mxu0 0
    %480 = vmatpush1.bf16.xpose.msra.mxu0 0
    %481 = vmatprep.subr.bf16.mxu0 0
    %482 = vmatpush1.bf16.xpose.msra.mxu0 0
    %483 = vmatprep.subr.bf16.mxu0 0
    %484 = vmatpush1.bf16.xpose.msra.mxu0 0
    %485 = vmatprep.subr.bf16.mxu0 0
    %486 = vmatpush1.bf16.xpose.msra.mxu0 0
    %487 = vmatprep.subr.bf16.mxu0 0
    %488 = vmatpush1.bf16.xpose.msra.mxu0 0
    %489 = vmatprep.subr.bf16.mxu0 0
    %490 = vmatpush1.bf16.xpose.msra.mxu0 0
    %491 = vmatprep.subr.bf16.mxu0 0
    %492 = vmatpush1.bf16.xpose.msra.mxu0 0
    %493 = vmatprep.subr.bf16.mxu0 0
    %494 = vmatpush1.bf16.xpose.msra.mxu0 0
    %495 = vmatprep.subr.bf16.mxu0 0
    %496 = vmatpush1.bf16.xpose.msra.mxu0 0
    %497 = vmatprep.subr.bf16.mxu0 0
    %498 = vmatpush1.bf16.xpose.msra.mxu0 0
    %499 = vmatprep.subr.bf16.mxu0 0
    %500 = vmatpush1.bf16.xpose.msra.mxu0 0
    %501 = vmatprep.mubr.bf16.mxu0 0
    %502 = vmatmul.mubr.bf16.gmra.mrb[0].mxu0 %v464
    %v503 = vpop.f32.mrb[0].mxu0
    %v504 = vadd.f32 0.0, %v503
    %v505 = vpop.f32.mrb[0].mxu0
    %v506 = vpop.f32.mrb[0].mxu0
    %v507 = vadd.f32 0.0, %v506
    %v508 = vpop.f32.mrb[0].mxu0
    %509 = vdwg.mxu0
    %511 = vrot.lane.b32.xlu0 %v407, 96
    %v512 = vpop.permute.xlu0 %511
    %v514 = vsel %vm412, %v407, 0
    %v517 = vsel %vm412, %v512, 0
    %519 = vmatprep.subr.bf16.mxu0 0
    %520 = vmatpush1.bf16.xpose.msra.mxu0 %v517
    %521 = vmatprep.subr.bf16.mxu0 0
    %522 = vmatpush1.bf16.xpose.msra.mxu0 0
    %523 = vmatprep.subr.bf16.mxu0 0
    %524 = vmatpush1.bf16.xpose.msra.mxu0 0
    %525 = vmatprep.subr.bf16.mxu0 0
    %526 = vmatpush1.bf16.xpose.msra.mxu0 0
    %527 = vmatprep.subr.bf16.mxu0 0
    %528 = vmatpush1.bf16.xpose.msra.mxu0 0
    %529 = vmatprep.subr.bf16.mxu0 0
    %530 = vmatpush1.bf16.xpose.msra.mxu0 0
    %531 = vmatprep.subr.bf16.mxu0 0
    %532 = vmatpush1.bf16.xpose.msra.mxu0 0
    %533 = vmatprep.subr.bf16.mxu0 0
    %534 = vmatpush1.bf16.xpose.msra.mxu0 0
    %535 = vmatprep.subr.bf16.mxu0 0
    %536 = vmatpush1.bf16.xpose.msra.mxu0 0
    %537 = vmatprep.subr.bf16.mxu0 0
    %538 = vmatpush1.bf16.xpose.msra.mxu0 0
    %539 = vmatprep.subr.bf16.mxu0 0
    %540 = vmatpush1.bf16.xpose.msra.mxu0 0
    %541 = vmatprep.subr.bf16.mxu0 0
    %542 = vmatpush1.bf16.xpose.msra.mxu0 0
    %543 = vmatprep.subr.bf16.mxu0 0
    %544 = vmatpush1.bf16.xpose.msra.mxu0 0
    %545 = vmatprep.subr.bf16.mxu0 0
    %546 = vmatpush1.bf16.xpose.msra.mxu0 0
    %547 = vmatprep.subr.bf16.mxu0 0
    %548 = vmatpush1.bf16.xpose.msra.mxu0 0
    %549 = vmatprep.subr.bf16.mxu0 0
    %550 = vmatpush1.bf16.xpose.msra.mxu0 0
    %551 = vmatprep.mubr.bf16.mxu0 0
    %552 = vmatmul.mubr.bf16.gmra.mrb[0].mxu0 %v514
    %v553 = vpop.f32.mrb[0].mxu0
    %v554 = vadd.f32 0.0, %v553
    %v555 = vpop.f32.mrb[0].mxu0
    %v556 = vpop.f32.mrb[0].mxu0
    %v557 = vadd.f32 0.0, %v556
    %v558 = vpop.f32.mrb[0].mxu0
    %559 = vdwg.mxu0
    %561 = vrot.lane.b32.xlu0 %v408, 96
    %v562 = vpop.permute.xlu0 %561
    %v564 = vsel %vm412, %v408, 0
    %v567 = vsel %vm412, %v562, 0
    %569 = vmatprep.subr.bf16.mxu0 0
    %570 = vmatpush1.bf16.xpose.msra.mxu0 %v567
    %571 = vmatprep.subr.bf16.mxu0 0
    %572 = vmatpush1.bf16.xpose.msra.mxu0 0
    %573 = vmatprep.subr.bf16.mxu0 0
    %574 = vmatpush1.bf16.xpose.msra.mxu0 0
    %575 = vmatprep.subr.bf16.mxu0 0
    %576 = vmatpush1.bf16.xpose.msra.mxu0 0
    %577 = vmatprep.subr.bf16.mxu0 0
    %578 = vmatpush1.bf16.xpose.msra.mxu0 0
    %579 = vmatprep.subr.bf16.mxu0 0
    %580 = vmatpush1.bf16.xpose.msra.mxu0 0
    %581 = vmatprep.subr.bf16.mxu0 0
    %582 = vmatpush1.bf16.xpose.msra.mxu0 0
    %583 = vmatprep.subr.bf16.mxu0 0
    %584 = vmatpush1.bf16.xpose.msra.mxu0 0
    %585 = vmatprep.subr.bf16.mxu0 0
    %586 = vmatpush1.bf16.xpose.msra.mxu0 0
    %587 = vmatprep.subr.bf16.mxu0 0
    %588 = vmatpush1.bf16.xpose.msra.mxu0 0
    %589 = vmatprep.subr.bf16.mxu0 0
    %590 = vmatpush1.bf16.xpose.msra.mxu0 0
    %591 = vmatprep.subr.bf16.mxu0 0
    %592 = vmatpush1.bf16.xpose.msra.mxu0 0
    %593 = vmatprep.subr.bf16.mxu0 0
    %594 = vmatpush1.bf16.xpose.msra.mxu0 0
    %595 = vmatprep.subr.bf16.mxu0 0
    %596 = vmatpush1.bf16.xpose.msra.mxu0 0
    %597 = vmatprep.subr.bf16.mxu0 0
    %598 = vmatpush1.bf16.xpose.msra.mxu0 0
    %599 = vmatprep.subr.bf16.mxu0 0
    %600 = vmatpush1.bf16.xpose.msra.mxu0 0
    %601 = vmatprep.mubr.bf16.mxu0 0
    %602 = vmatmul.mubr.bf16.gmra.mrb[0].mxu0 %v564
    %v603 = vpop.f32.mrb[0].mxu0
    %v604 = vadd.f32 0.0, %v603
    %v605 = vpop.f32.mrb[0].mxu0
    %v606 = vpop.f32.mrb[0].mxu0
    %v607 = vadd.f32 0.0, %v606
    %v608 = vpop.f32.mrb[0].mxu0
    %609 = vdwg.mxu0
    %v610 = vmul.f32 %v454, 0.35355338
    %v611 = vmul.f32 %v457, 0.35355338
    %v612 = vmul.f32 %v504, 0.35355338
    %v613 = vmul.f32 %v507, 0.35355338
    %v614 = vmul.f32 %v554, 0.35355338
    %v615 = vmul.f32 %v557, 0.35355338
    %v616 = vmul.f32 %v604, 0.35355338
    %v617 = vmul.f32 %v607, 0.35355338
    %v618 = vadd.f32 %v610, %v271
    %v619 = vadd.f32 %v611, %v272
    %v620 = vadd.f32 %v612, %v271
    %v621 = vadd.f32 %v613, %v272
    %v622 = vadd.f32 %v614, %v271
    %v623 = vadd.f32 %v615, %v272
    %v624 = vadd.f32 %v616, %v271
    %v625 = vadd.f32 %v617, %v272
    %vm626 = vcmask 80896
    %v627 = vsel %vm626, %v618, -inf
    %628 = vmax.xlane.f32.xlu0 %v627
    %v629 = vpop.xlane.xlu0 %628
    %vm630 = vcmask 74752
    %v631 = vsel %vm630, %v619, -inf
    %632 = vmax.xlane.f32.xlu0 %v631
    %v633 = vpop.xlane.xlu0 %632
    %v634 = vsel %vm626, %v620, -inf
    %635 = vmax.xlane.f32.xlu0 %v634
    %v636 = vpop.xlane.xlu0 %635
    %v637 = vsel %vm630, %v621, -inf
    %638 = vmax.xlane.f32.xlu0 %v637
    %v639 = vpop.xlane.xlu0 %638
    %v640 = vsel %vm626, %v622, -inf
    %641 = vmax.xlane.f32.xlu0 %v640
    %v642 = vpop.xlane.xlu0 %641
    %v643 = vsel %vm630, %v623, -inf
    %644 = vmax.xlane.f32.xlu0 %v643
    %v645 = vpop.xlane.xlu0 %644
    %v646 = vsel %vm626, %v624, -inf
    %647 = vmax.xlane.f32.xlu0 %v646
    %v648 = vpop.xlane.xlu0 %647
    %v649 = vsel %vm630, %v625, -inf
    %650 = vmax.xlane.f32.xlu0 %v649
    %v651 = vpop.xlane.xlu0 %650
    %v652 = vsub.f32 %v618, %v629
    %v653 = vsub.f32 %v619, %v633
    %v654 = vsub.f32 %v620, %v636
    %v655 = vsub.f32 %v621, %v639
    %v656 = vsub.f32 %v622, %v642
    %v657 = vsub.f32 %v623, %v645
    %v658 = vsub.f32 %v624, %v648
    %v659 = vsub.f32 %v625, %v651
    %v660 = vmul.f32 %v652, 1.442695
    %v661 = vpow.pop %v660
    %v662 = vmul.f32 %v653, 1.442695
    %v663 = vpow.pop %v662
    %v664 = vmul.f32 %v654, 1.442695
    %v665 = vpow.pop %v664
    %v666 = vmul.f32 %v655, 1.442695
    %v667 = vpow.pop %v666
    %v668 = vmul.f32 %v656, 1.442695
    %v669 = vpow.pop %v668
    %v670 = vmul.f32 %v657, 1.442695
    %v671 = vpow.pop %v670
    %v672 = vmul.f32 %v658, 1.442695
    %v673 = vpow.pop %v672
    %v674 = vmul.f32 %v659, 1.442695
    %v675 = vpow.pop %v674
    %v676 = vsel %vm626, %v661, 0.0
    %677 = vadd.xlane.f32.xlu0 %v676
    %v678 = vpop.xlane.xlu0 %677
    %v679 = vsel %vm630, %v663, 0.0
    %680 = vadd.xlane.f32.xlu0 %v679
    %v681 = vpop.xlane.xlu0 %680
    %v682 = vsel %vm626, %v665, 0.0
    %683 = vadd.xlane.f32.xlu0 %v682
    %v684 = vpop.xlane.xlu0 %683
    %v685 = vsel %vm630, %v667, 0.0
    %686 = vadd.xlane.f32.xlu0 %v685
    %v687 = vpop.xlane.xlu0 %686
    %v688 = vsel %vm626, %v669, 0.0
    %689 = vadd.xlane.f32.xlu0 %v688
    %v690 = vpop.xlane.xlu0 %689
    %v691 = vsel %vm630, %v671, 0.0
    %692 = vadd.xlane.f32.xlu0 %v691
    %v693 = vpop.xlane.xlu0 %692
    %v694 = vsel %vm626, %v673, 0.0
    %695 = vadd.xlane.f32.xlu0 %v694
    %v696 = vpop.xlane.xlu0 %695
    %v697 = vsel %vm630, %v675, 0.0
    %698 = vadd.xlane.f32.xlu0 %v697
    %v699 = vpop.xlane.xlu0 %698
    %v700 = vrcp.pop %v678
    %v701 = vrcp.pop %v681
    %v702 = vrcp.pop %v684
    %v703 = vrcp.pop %v687
    %v704 = vrcp.pop %v690
    %v705 = vrcp.pop %v693
    %v706 = vrcp.pop %v696
    %v707 = vrcp.pop %v699
    %v708 = vmul.f32 %v661, %v700
    %v709 = vmul.f32 %v663, %v701
    %v710 = vmul.f32 %v665, %v702
    %v711 = vmul.f32 %v667, %v703
    %v712 = vmul.f32 %v669, %v704
    %v713 = vmul.f32 %v671, %v705
    %v714 = vmul.f32 %v673, %v706
    %v715 = vmul.f32 %v675, %v707
    %v716 = vpack.c.bf16 %v709, %v708
    %v717 = vpack.c.bf16 %v711, %v710
    %v718 = vpack.c.bf16 %v713, %v712
    %v719 = vpack.c.bf16 %v715, %v714
    %720 = vrot.lane.b32.xlu0 %v405, 64
    %v721 = vpop.permute.xlu0 %720
    %v723 = vsel %vm626, %v716, 0
    %vm725 = vcmask 1044480
    %v727 = vsel %vm725, %v721, 0
    %729 = vmatprep.subr.bf16.mxu0 0
    %730 = vmatpush1.bf16.msra.mxu0 %v727
    %731 = vmatprep.subr.bf16.mxu0 0
    %732 = vmatpush1.bf16.msra.mxu0 0
    %733 = vmatprep.subr.bf16.mxu0 0
    %734 = vmatpush1.bf16.msra.mxu0 0
    %735 = vmatprep.subr.bf16.mxu0 0
    %736 = vmatpush1.bf16.msra.mxu0 0
    %737 = vmatprep.subr.bf16.mxu0 0
    %738 = vmatpush1.bf16.msra.mxu0 0
    %739 = vmatprep.subr.bf16.mxu0 0
    %740 = vmatpush1.bf16.msra.mxu0 0
    %741 = vmatprep.subr.bf16.mxu0 0
    %742 = vmatpush1.bf16.msra.mxu0 0
    %743 = vmatprep.subr.bf16.mxu0 0
    %744 = vmatpush1.bf16.msra.mxu0 0
    %745 = vmatprep.subr.bf16.mxu0 0
    %746 = vmatpush1.bf16.msra.mxu0 0
    %747 = vmatprep.subr.bf16.mxu0 0
    %748 = vmatpush1.bf16.msra.mxu0 0
    %749 = vmatprep.subr.bf16.mxu0 0
    %750 = vmatpush1.bf16.msra.mxu0 0
    %751 = vmatprep.subr.bf16.mxu0 0
    %752 = vmatpush1.bf16.msra.mxu0 0
    %753 = vmatprep.subr.bf16.mxu0 0
    %754 = vmatpush1.bf16.msra.mxu0 0
    %755 = vmatprep.subr.bf16.mxu0 0
    %756 = vmatpush1.bf16.msra.mxu0 0
    %757 = vmatprep.subr.bf16.mxu0 0
    %758 = vmatpush1.bf16.msra.mxu0 0
    %759 = vmatprep.subr.bf16.mxu0 0
    %760 = vmatpush1.bf16.msra.mxu0 0
    %761 = vmatprep.mubr.bf16.mxu0 0
    %762 = vmatmul.mubr.bf16.gmra.mrb[0].mxu0 %v723
    %v763 = vpop.f32.mrb[0].mxu0
    %v764 = vadd.f32 0.0, %v763
    %v765 = vpop.f32.mrb[0].mxu0
    %v766 = vpop.f32.mrb[0].mxu0
    %v767 = vadd.f32 0.0, %v766
    %v768 = vpop.f32.mrb[0].mxu0
    %769 = vdwg.mxu0
    %770 = vrot.lane.b32.xlu0 %v406, 64
    %v771 = vpop.permute.xlu0 %770
    %v773 = vsel %vm626, %v717, 0
    %v776 = vsel %vm725, %v771, 0
    %778 = vmatprep.subr.bf16.mxu0 0
    %779 = vmatpush1.bf16.msra.mxu0 %v776
    %780 = vmatprep.subr.bf16.mxu0 0
    %781 = vmatpush1.bf16.msra.mxu0 0
    %782 = vmatprep.subr.bf16.mxu0 0
    %783 = vmatpush1.bf16.msra.mxu0 0
    %784 = vmatprep.subr.bf16.mxu0 0
    %785 = vmatpush1.bf16.msra.mxu0 0
    %786 = vmatprep.subr.bf16.mxu0 0
    %787 = vmatpush1.bf16.msra.mxu0 0
    %788 = vmatprep.subr.bf16.mxu0 0
    %789 = vmatpush1.bf16.msra.mxu0 0
    %790 = vmatprep.subr.bf16.mxu0 0
    %791 = vmatpush1.bf16.msra.mxu0 0
    %792 = vmatprep.subr.bf16.mxu0 0
    %793 = vmatpush1.bf16.msra.mxu0 0
    %794 = vmatprep.subr.bf16.mxu0 0
    %795 = vmatpush1.bf16.msra.mxu0 0
    %796 = vmatprep.subr.bf16.mxu0 0
    %797 = vmatpush1.bf16.msra.mxu0 0
    %798 = vmatprep.subr.bf16.mxu0 0
    %799 = vmatpush1.bf16.msra.mxu0 0
    %800 = vmatprep.subr.bf16.mxu0 0
    %801 = vmatpush1.bf16.msra.mxu0 0
    %802 = vmatprep.subr.bf16.mxu0 0
    %803 = vmatpush1.bf16.msra.mxu0 0
    %804 = vmatprep.subr.bf16.mxu0 0
    %805 = vmatpush1.bf16.msra.mxu0 0
    %806 = vmatprep.subr.bf16.mxu0 0
    %807 = vmatpush1.bf16.msra.mxu0 0
    %808 = vmatprep.subr.bf16.mxu0 0
    %809 = vmatpush1.bf16.msra.mxu0 0
    %810 = vmatprep.mubr.bf16.mxu0 0
    %811 = vmatmul.mubr.bf16.gmra.mrb[0].mxu0 %v773
    %v812 = vpop.f32.mrb[0].mxu0
    %v813 = vadd.f32 0.0, %v812
    %v814 = vpop.f32.mrb[0].mxu0
    %v815 = vpop.f32.mrb[0].mxu0
    %v816 = vadd.f32 0.0, %v815
    %v817 = vpop.f32.mrb[0].mxu0
    %818 = vdwg.mxu0
    %819 = vrot.lane.b32.xlu0 %v407, 64
    %v820 = vpop.permute.xlu0 %819
    %v822 = vsel %vm626, %v718, 0
    %v825 = vsel %vm725, %v820, 0
    %827 = vmatprep.subr.bf16.mxu0 0
    %828 = vmatpush1.bf16.msra.mxu0 %v825
    %829 = vmatprep.subr.bf16.mxu0 0
    %830 = vmatpush1.bf16.msra.mxu0 0
    %831 = vmatprep.subr.bf16.mxu0 0
    %832 = vmatpush1.bf16.msra.mxu0 0
    %833 = vmatprep.subr.bf16.mxu0 0
    %834 = vmatpush1.bf16.msra.mxu0 0
    %835 = vmatprep.subr.bf16.mxu0 0
    %836 = vmatpush1.bf16.msra.mxu0 0
    %837 = vmatprep.subr.bf16.mxu0 0
    %838 = vmatpush1.bf16.msra.mxu0 0
    %839 = vmatprep.subr.bf16.mxu0 0
    %840 = vmatpush1.bf16.msra.mxu0 0
    %841 = vmatprep.subr.bf16.mxu0 0
    %842 = vmatpush1.bf16.msra.mxu0 0
    %843 = vmatprep.subr.bf16.mxu0 0
    %844 = vmatpush1.bf16.msra.mxu0 0
    %845 = vmatprep.subr.bf16.mxu0 0
    %846 = vmatpush1.bf16.msra.mxu0 0
    %847 = vmatprep.subr.bf16.mxu0 0
    %848 = vmatpush1.bf16.msra.mxu0 0
    %849 = vmatprep.subr.bf16.mxu0 0
    %850 = vmatpush1.bf16.msra.mxu0 0
    %851 = vmatprep.subr.bf16.mxu0 0
    %852 = vmatpush1.bf16.msra.mxu0 0
    %853 = vmatprep.subr.bf16.mxu0 0
    %854 = vmatpush1.bf16.msra.mxu0 0
    %855 = vmatprep.subr.bf16.mxu0 0
    %856 = vmatpush1.bf16.msra.mxu0 0
    %857 = vmatprep.subr.bf16.mxu0 0
    %858 = vmatpush1.bf16.msra.mxu0 0
    %859 = vmatprep.mubr.bf16.mxu0 0
    %860 = vmatmul.mubr.bf16.gmra.mrb[0].mxu0 %v822
    %v861 = vpop.f32.mrb[0].mxu0
    %v862 = vadd.f32 0.0, %v861
    %v863 = vpop.f32.mrb[0].mxu0
    %v864 = vpop.f32.mrb[0].mxu0
    %v865 = vadd.f32 0.0, %v864
    %v866 = vpop.f32.mrb[0].mxu0
    %867 = vdwg.mxu0
    %868 = vrot.lane.b32.xlu0 %v408, 64
    %v869 = vpop.permute.xlu0 %868
    %v871 = vsel %vm626, %v719, 0
    %v874 = vsel %vm725, %v869, 0
    %876 = vmatprep.subr.bf16.mxu0 0
    %877 = vmatpush1.bf16.msra.mxu0 %v874
    %878 = vmatprep.subr.bf16.mxu0 0
    %879 = vmatpush1.bf16.msra.mxu0 0
    %880 = vmatprep.subr.bf16.mxu0 0
    %881 = vmatpush1.bf16.msra.mxu0 0
    %882 = vmatprep.subr.bf16.mxu0 0
    %883 = vmatpush1.bf16.msra.mxu0 0
    %884 = vmatprep.subr.bf16.mxu0 0
    %885 = vmatpush1.bf16.msra.mxu0 0
    %886 = vmatprep.subr.bf16.mxu0 0
    %887 = vmatpush1.bf16.msra.mxu0 0
    %888 = vmatprep.subr.bf16.mxu0 0
    %889 = vmatpush1.bf16.msra.mxu0 0
    %890 = vmatprep.subr.bf16.mxu0 0
    %891 = vmatpush1.bf16.msra.mxu0 0
    %892 = vmatprep.subr.bf16.mxu0 0
    %893 = vmatpush1.bf16.msra.mxu0 0
    %894 = vmatprep.subr.bf16.mxu0 0
    %895 = vmatpush1.bf16.msra.mxu0 0
    %896 = vmatprep.subr.bf16.mxu0 0
    %897 = vmatpush1.bf16.msra.mxu0 0
    %898 = vmatprep.subr.bf16.mxu0 0
    %899 = vmatpush1.bf16.msra.mxu0 0
    %900 = vmatprep.subr.bf16.mxu0 0
    %901 = vmatpush1.bf16.msra.mxu0 0
    %902 = vmatprep.subr.bf16.mxu0 0
    %903 = vmatpush1.bf16.msra.mxu0 0
    %904 = vmatprep.subr.bf16.mxu0 0
    %905 = vmatpush1.bf16.msra.mxu0 0
    %906 = vmatprep.subr.bf16.mxu0 0
    %907 = vmatpush1.bf16.msra.mxu0 0
    %908 = vmatprep.mubr.bf16.mxu0 0
    %909 = vmatmul.mubr.bf16.gmra.mrb[0].mxu0 %v871
    %v910 = vpop.f32.mrb[0].mxu0
    %v911 = vadd.f32 0.0, %v910
    %v912 = vpop.f32.mrb[0].mxu0
    %v913 = vpop.f32.mrb[0].mxu0
    %v914 = vadd.f32 0.0, %v913
    %v915 = vpop.f32.mrb[0].mxu0
    %916 = vdwg.mxu0
    %919 = vrot.lane.b32.xlu0 %v813, 8
    %v920 = vpop.permute.xlu0 %919
    %921 = vrot.lane.b32.xlu0 %v816, 8
    %v922 = vpop.permute.xlu0 %921
    %927 = vrot.lane.b32.xlu0 %v862, 16
    %v928 = vpop.permute.xlu0 %927
    %929 = vrot.lane.b32.xlu0 %v865, 16
    %v930 = vpop.permute.xlu0 %929
    %935 = vrot.lane.b32.xlu0 %v911, 24
    %v936 = vpop.permute.xlu0 %935
    %937 = vrot.lane.b32.xlu0 %v914, 24
    %v938 = vpop.permute.xlu0 %937
    %v941 = vsel %vm412, %v764, %v920
    %v942 = vsel %vm412, %v767, %v922
    %vm943 = vcmask 130048
    %v944 = vsel %vm943, %v941, %v928
    %v945 = vsel %vm943, %v942, %v930
    %vm946 = vcmask 195584
    %v947 = vsel %vm946, %v944, %v936
    %v948 = vsel %vm946, %v945, %v938
    %v949 = vld [vmem:[%s10] sm:$0xf]
    %v950 = vld [vmem:[%s10 + $0x4] sm:$0xf]
    %v951 = vld [vmem:[%s10 + $0x8] sm:$0xf]
    %v952 = vld [vmem:[%s10 + $0xc] sm:$0xf]
    %v953 = vpack.c.bf16 %v948, %v947
    %v958 = vunpack.c.l.b16 %v949
    %v959 = vunpack.c.l.b16 %v950
    %v960 = vunpack.c.l.b16 %v951
    %v961 = vunpack.c.l.b16 %v952
    %v962 = vpack.c.b16 %v959, %v958
    %v963 = vpack.c.b16 %v961, %v960
    %v967 = vsel %vm226, %v953, 0
    %969 = vmatprep.subr.bf16.mxu0 0
    %970 = vmatpush1.bf16.msra.mxu0 %v962
    %971 = vmatprep.subr.bf16.mxu0 0
    %972 = vmatpush1.bf16.msra.mxu0 %v963
    %973 = vmatprep.subr.bf16.mxu0 0
    %974 = vmatpush1.bf16.msra.mxu0 0
    %975 = vmatprep.subr.bf16.mxu0 0
    %976 = vmatpush1.bf16.msra.mxu0 0
    %977 = vmatprep.subr.bf16.mxu0 0
    %978 = vmatpush1.bf16.msra.mxu0 0
    %979 = vmatprep.subr.bf16.mxu0 0
    %980 = vmatpush1.bf16.msra.mxu0 0
    %981 = vmatprep.subr.bf16.mxu0 0
    %982 = vmatpush1.bf16.msra.mxu0 0
    %983 = vmatprep.subr.bf16.mxu0 0
    %984 = vmatpush1.bf16.msra.mxu0 0
    %985 = vmatprep.subr.bf16.mxu0 0
    %986 = vmatpush1.bf16.msra.mxu0 0
    %987 = vmatprep.subr.bf16.mxu0 0
    %988 = vmatpush1.bf16.msra.mxu0 0
    %989 = vmatprep.subr.bf16.mxu0 0
    %990 = vmatpush1.bf16.msra.mxu0 0
    %991 = vmatprep.subr.bf16.mxu0 0
    %992 = vmatpush1.bf16.msra.mxu0 0
    %993 = vmatprep.subr.bf16.mxu0 0
    %994 = vmatpush1.bf16.msra.mxu0 0
    %995 = vmatprep.subr.bf16.mxu0 0
    %996 = vmatpush1.bf16.msra.mxu0 0
    %997 = vmatprep.subr.bf16.mxu0 0
    %998 = vmatpush1.bf16.msra.mxu0 0
    %999 = vmatprep.subr.bf16.mxu0 0
    %1000 = vmatpush1.bf16.msra.mxu0 0
    %1001 = vmatprep.mubr.bf16.mxu0 0
    %1002 = vmatmul.mubr.bf16.gmra.mrb[0].mxu0 %v967
    %v1003 = vpop.f32.mrb[0].mxu0
    %v1004 = vadd.f32 0.0, %v1003
    %v1005 = vpop.f32.mrb[0].mxu0
    %v1006 = vpop.f32.mrb[0].mxu0
    %v1007 = vadd.f32 0.0, %v1006
    %v1008 = vpop.f32.mrb[0].mxu0
    %1009 = vdwg.mxu0
    %v1010 = vadd.f32 %v269, %v1004
    %v1011 = vadd.f32 %v270, %v1007
    %v1012 = vld [vmem:[%s11] sm:$0x1]
    %v1014 = vlaneseq
    %v1015 = vshrl.u32 %v1014, 7
    %v1016 = vsub.s32 0, %v1015
    %v1017 = vrot.slane %v1012, %v1016
    %v1019 = vadd.f32 %v1010, %v1017
    %v1020 = vadd.f32 %v1011, %v1017
    %v1021 = vld [vmem:[%s12] sm:$0x1]
    %v1022 = vld [vmem:[%s13] sm:$0x1]
    %v1023 = vsel %vm226, %v1019, 0.0
    %1024 = vadd.xlane.f32.xlu0 %v1023
    %v1025 = vpop.xlane.xlu0 %1024
    %v1026 = vsel %vm230, %v1020, 0.0
    %1027 = vadd.xlane.f32.xlu0 %v1026
    %v1028 = vpop.xlane.xlu0 %1027
    %v1029 = vmul.f32 %v1025, %v234
    %v1030 = vmul.f32 %v1028, %v234
    %v1031 = vsub.f32 %v1019, %v1029
    %v1032 = vsub.f32 %v1020, %v1030
    %v1033 = vmul.f32 %v1031, %v1031
    %v1034 = vmul.f32 %v1032, %v1032
    %v1035 = vsel %vm226, %v1033, 0.0
    %1036 = vadd.xlane.f32.xlu0 %v1035
    %v1037 = vpop.xlane.xlu0 %1036
    %v1038 = vsel %vm230, %v1034, 0.0
    %1039 = vadd.xlane.f32.xlu0 %v1038
    %v1040 = vpop.xlane.xlu0 %1039
    %v1041 = vmul.f32 %v1037, %v234
    %v1042 = vmul.f32 %v1040, %v234
    %v1043 = vadd.f32 %v1041, 1e-05
    %v1044 = vadd.f32 %v1042, 1e-05
    %v1045 = vrsqrt.pop %v1043
    %v1046 = vrsqrt.pop %v1044
    %v1047 = vmul.f32 %v1031, %v1045
    %v1048 = vmul.f32 %v1032, %v1046
    %v1050 = vlaneseq
    %v1051 = vshrl.u32 %v1050, 7
    %v1052 = vsub.s32 0, %v1051
    %v1053 = vrot.slane %v1021, %v1052
    %v1055 = vmul.f32 %v1047, %v1053
    %v1056 = vmul.f32 %v1048, %v1053
    %v1058 = vlaneseq
    %v1059 = vshrl.u32 %v1058, 7
    %v1060 = vsub.s32 0, %v1059
    %v1061 = vrot.slane %v1022, %v1060
    %v1063 = vadd.f32 %v1055, %v1061
    %v1064 = vadd.f32 %v1056, %v1061
    %v1065 = vld [vmem:[%s14] sm:$0xf]
    %v1066 = vld [vmem:[%s14 + $0x4] sm:$0xf]
    %v1067 = vld [vmem:[%s14 + $0x8] sm:$0xf]
    %v1068 = vld [vmem:[%s14 + $0xc] sm:$0xf]
    %v1069 = vpack.c.bf16 %v1064, %v1063
    %v1070 = vld [vmem:[%s15] sm:$0x1]
    %v1072 = vlaneseq
    %v1073 = vshrl.u32 %v1072, 7
    %v1074 = vsub.s32 0, %v1073
    %v1075 = vrot.slane %v1070, %v1074
    %v1081 = vunpack.c.l.b16 %v1065
    %v1082 = vunpack.c.l.b16 %v1066
    %v1083 = vunpack.c.l.b16 %v1067
    %v1084 = vunpack.c.l.b16 %v1068
    %v1085 = vpack.c.b16 %v1082, %v1081
    %v1086 = vpack.c.b16 %v1084, %v1083
    %v1090 = vsel %vm226, %v1069, 0
    %1092 = vmatprep.subr.bf16.mxu0 0
    %1093 = vmatpush1.bf16.msra.mxu0 %v1085
    %1094 = vmatprep.subr.bf16.mxu0 0
    %1095 = vmatpush1.bf16.msra.mxu0 %v1086
    %1096 = vmatprep.subr.bf16.mxu0 0
    %1097 = vmatpush1.bf16.msra.mxu0 0
    %1098 = vmatprep.subr.bf16.mxu0 0
    %1099 = vmatpush1.bf16.msra.mxu0 0
    %1100 = vmatprep.subr.bf16.mxu0 0
    %1101 = vmatpush1.bf16.msra.mxu0 0
    %1102 = vmatprep.subr.bf16.mxu0 0
    %1103 = vmatpush1.bf16.msra.mxu0 0
    %1104 = vmatprep.subr.bf16.mxu0 0
    %1105 = vmatpush1.bf16.msra.mxu0 0
    %1106 = vmatprep.subr.bf16.mxu0 0
    %1107 = vmatpush1.bf16.msra.mxu0 0
    %1108 = vmatprep.subr.bf16.mxu0 0
    %1109 = vmatpush1.bf16.msra.mxu0 0
    %1110 = vmatprep.subr.bf16.mxu0 0
    %1111 = vmatpush1.bf16.msra.mxu0 0
    %1112 = vmatprep.subr.bf16.mxu0 0
    %1113 = vmatpush1.bf16.msra.mxu0 0
    %1114 = vmatprep.subr.bf16.mxu0 0
    %1115 = vmatpush1.bf16.msra.mxu0 0
    %1116 = vmatprep.subr.bf16.mxu0 0
    %1117 = vmatpush1.bf16.msra.mxu0 0
    %1118 = vmatprep.subr.bf16.mxu0 0
    %1119 = vmatpush1.bf16.msra.mxu0 0
    %1120 = vmatprep.subr.bf16.mxu0 0
    %1121 = vmatpush1.bf16.msra.mxu0 0
    %1122 = vmatprep.subr.bf16.mxu0 0
    %1123 = vmatpush1.bf16.msra.mxu0 0
    %1124 = vmatprep.mubr.bf16.mxu0 0
    %1125 = vmatmul.mubr.bf16.gmra.mrb[0].mxu0 %v1090
    %v1126 = vpop.f32.mrb[0].mxu0
    %v1127 = vadd.f32 %v1075, %v1126
    %v1128 = vpop.f32.mrb[0].mxu0
    %v1129 = vpop.f32.mrb[0].mxu0
    %v1130 = vadd.f32 %v1075, %v1129
    %v1131 = vpop.f32.mrb[0].mxu0
    %1132 = vdwg.mxu0
    %v1133 = vmul.f32 %v1127, 1.702
    %v1134 = vmul.f32 %v1130, 1.702
    %v1135 = vxor.u32 %v1133, 2147483648
    %v1136 = vxor.u32 %v1134, 2147483648
    %v1137 = vmul.f32 %v1135, 1.442695
    %v1138 = vpow.pop %v1137
    %v1139 = vmul.f32 %v1136, 1.442695
    %v1140 = vpow.pop %v1139
    %v1141 = vadd.f32 %v1138, 1.0
    %v1142 = vadd.f32 %v1140, 1.0
    %v1143 = vrcp.pop %v1141
    %v1144 = vmul.f32 1.0, %v1143
    %v1145 = vrcp.pop %v1142
    %v1146 = vmul.f32 1.0, %v1145
    %v1147 = vmul.f32 %v1127, %v1144
    %v1148 = vmul.f32 %v1130, %v1146
    %v1149 = vld [vmem:[%s16] sm:$0xf]
    %v1150 = vld [vmem:[%s16 + $0x4] sm:$0xf]
    %v1151 = vld [vmem:[%s16 + $0x8] sm:$0xf]
    %v1152 = vld [vmem:[%s16 + $0xc] sm:$0xf]
    %v1153 = vld [vmem:[%s16 + $0x10] sm:$0xf]
    %v1154 = vld [vmem:[%s16 + $0x14] sm:$0xf]
    %v1155 = vld [vmem:[%s16 + $0x18] sm:$0xf]
    %v1156 = vld [vmem:[%s16 + $0x1c] sm:$0xf]
    %v1157 = vld [vmem:[%s16 + $0x20] sm:$0xf]
    %v1158 = vld [vmem:[%s16 + $0x24] sm:$0xf]
    %v1159 = vld [vmem:[%s16 + $0x28] sm:$0xf]
    %v1160 = vld [vmem:[%s16 + $0x2c] sm:$0xf]
    %v1161 = vld [vmem:[%s16 + $0x30] sm:$0xf]
    %v1162 = vld [vmem:[%s16 + $0x34] sm:$0xf]
    %v1163 = vld [vmem:[%s16 + $0x38] sm:$0xf]
    %v1164 = vld [vmem:[%s16 + $0x3c] sm:$0xf]
    %v1165 = vpack.c.bf16 %v1148, %v1147
    %v1182 = vunpack.c.l.b16 %v1149
    %v1183 = vunpack.c.l.b16 %v1150
    %v1184 = vunpack.c.l.b16 %v1151
    %v1185 = vunpack.c.l.b16 %v1152
    %v1186 = vunpack.c.l.b16 %v1153
    %v1187 = vunpack.c.l.b16 %v1154
    %v1188 = vunpack.c.l.b16 %v1155
    %v1189 = vunpack.c.l.b16 %v1156
    %v1190 = vunpack.c.l.b16 %v1157
    %v1191 = vunpack.c.l.b16 %v1158
    %v1192 = vunpack.c.l.b16 %v1159
    %v1193 = vunpack.c.l.b16 %v1160
    %v1194 = vunpack.c.l.b16 %v1161
    %v1195 = vunpack.c.l.b16 %v1162
    %v1196 = vunpack.c.l.b16 %v1163
    %v1197 = vunpack.c.l.b16 %v1164
    %v1198 = vpack.c.b16 %v1183, %v1182
    %v1199 = vpack.c.b16 %v1185, %v1184
    %v1200 = vpack.c.b16 %v1187, %v1186
    %v1201 = vpack.c.b16 %v1189, %v1188
    %v1202 = vpack.c.b16 %v1191, %v1190
    %v1203 = vpack.c.b16 %v1193, %v1192
    %v1204 = vpack.c.b16 %v1195, %v1194
    %v1205 = vpack.c.b16 %v1197, %v1196
    %1214 = vmatprep.subr.bf16.mxu0 0
    %1215 = vmatpush1.bf16.msra.mxu0 %v1198
    %1216 = vmatprep.subr.bf16.mxu0 0
    %1217 = vmatpush1.bf16.msra.mxu0 %v1199
    %1218 = vmatprep.subr.bf16.mxu0 0
    %1219 = vmatpush1.bf16.msra.mxu0 %v1200
    %1220 = vmatprep.subr.bf16.mxu0 0
    %1221 = vmatpush1.bf16.msra.mxu0 %v1201
    %1222 = vmatprep.subr.bf16.mxu0 0
    %1223 = vmatpush1.bf16.msra.mxu0 %v1202
    %1224 = vmatprep.subr.bf16.mxu0 0
    %1225 = vmatpush1.bf16.msra.mxu0 %v1203
    %1226 = vmatprep.subr.bf16.mxu0 0
    %1227 = vmatpush1.bf16.msra.mxu0 %v1204
    %1228 = vmatprep.subr.bf16.mxu0 0
    %1229 = vmatpush1.bf16.msra.mxu0 %v1205
    %1230 = vmatprep.subr.bf16.mxu0 0
    %1231 = vmatpush1.bf16.msra.mxu0 0
    %1232 = vmatprep.subr.bf16.mxu0 0
    %1233 = vmatpush1.bf16.msra.mxu0 0
    %1234 = vmatprep.subr.bf16.mxu0 0
    %1235 = vmatpush1.bf16.msra.mxu0 0
    %1236 = vmatprep.subr.bf16.mxu0 0
    %1237 = vmatpush1.bf16.msra.mxu0 0
    %1238 = vmatprep.subr.bf16.mxu0 0
    %1239 = vmatpush1.bf16.msra.mxu0 0
    %1240 = vmatprep.subr.bf16.mxu0 0
    %1241 = vmatpush1.bf16.msra.mxu0 0
    %1242 = vmatprep.subr.bf16.mxu0 0
    %1243 = vmatpush1.bf16.msra.mxu0 0
    %1244 = vmatprep.subr.bf16.mxu0 0
    %1245 = vmatpush1.bf16.msra.mxu0 0
    %1246 = vmatprep.mubr.bf16.mxu0 0
    %1247 = vmatmul.mubr.bf16.gmra.mrb[0].mxu0 %v1165
    %v1248 = vpop.f32.mrb[0].mxu0
    %v1249 = vadd.f32 0.0, %v1248
    %v1250 = vpop.f32.mrb[0].mxu0
    %v1251 = vpop.f32.mrb[0].mxu0
    %v1252 = vadd.f32 0.0, %v1251
    %v1253 = vpop.f32.mrb[0].mxu0
    %1254 = vdwg.mxu0
    %v1255 = vadd.f32 %v1019, %v1249
    %v1256 = vadd.f32 %v1020, %v1252
    %v1257 = vld [vmem:[%s17] sm:$0x1]
    %v1259 = vlaneseq
    %v1260 = vshrl.u32 %v1259, 7
    %v1261 = vsub.s32 0, %v1260
    %v1262 = vrot.slane %v1257, %v1261
    %v1264 = vadd.f32 %v1255, %v1262
    %v1265 = vadd.f32 %v1256, %v1262
    %s1266 = scalar_lea.vmem %s6, 1
    %v1267 = vld [vmem:[%s1266] sm:$0x1]
    %s1268 = scalar_lea.vmem %s7, 1
    %v1269 = vld [vmem:[%s1268] sm:$0x1]
    %v1270 = vsel %vm226, %v1264, 0.0
    %1271 = vadd.xlane.f32.xlu0 %v1270
    %v1272 = vpop.xlane.xlu0 %1271
    %v1273 = vsel %vm230, %v1265, 0.0
    %1274 = vadd.xlane.f32.xlu0 %v1273
    %v1275 = vpop.xlane.xlu0 %1274
    %v1276 = vmul.f32 %v1272, %v234
    %v1277 = vmul.f32 %v1275, %v234
    %v1278 = vsub.f32 %v1264, %v1276
    %v1279 = vsub.f32 %v1265, %v1277
    %v1280 = vmul.f32 %v1278, %v1278
    %v1281 = vmul.f32 %v1279, %v1279
    %v1282 = vsel %vm226, %v1280, 0.0
    %1283 = vadd.xlane.f32.xlu0 %v1282
    %v1284 = vpop.xlane.xlu0 %1283
    %v1285 = vsel %vm230, %v1281, 0.0
    %1286 = vadd.xlane.f32.xlu0 %v1285
    %v1287 = vpop.xlane.xlu0 %1286
    %v1288 = vmul.f32 %v1284, %v234
    %v1289 = vmul.f32 %v1287, %v234
    %v1290 = vadd.f32 %v1288, 1e-05
    %v1291 = vadd.f32 %v1289, 1e-05
    %v1292 = vrsqrt.pop %v1290
    %v1293 = vrsqrt.pop %v1291
    %v1294 = vmul.f32 %v1278, %v1292
    %v1295 = vmul.f32 %v1279, %v1293
    %v1297 = vlaneseq
    %v1298 = vshrl.u32 %v1297, 7
    %v1299 = vsub.s32 0, %v1298
    %v1300 = vrot.slane %v1267, %v1299
    %v1302 = vmul.f32 %v1294, %v1300
    %v1303 = vmul.f32 %v1295, %v1300
    %v1305 = vlaneseq
    %v1306 = vshrl.u32 %v1305, 7
    %v1307 = vsub.s32 0, %v1306
    %v1308 = vrot.slane %v1269, %v1307
    %v1310 = vadd.f32 %v1302, %v1308
    %v1311 = vadd.f32 %v1303, %v1308
    %s1312 = scalar_lea.vmem %s8, 16
    %v1313 = vld [vmem:[%s1312] sm:$0xf]
    %v1314 = vld [vmem:[%s1312 + $0x4] sm:$0xf]
    %v1315 = vld [vmem:[%s1312 + $0x8] sm:$0xf]
    %v1316 = vld [vmem:[%s1312 + $0xc] sm:$0xf]
    %v1317 = vpack.c.bf16 %v1311, %v1310
    %s1318 = scalar_lea.vmem %s9, 1
    %v1319 = vld [vmem:[%s1318] sm:$0x1]
    %v1321 = vlaneseq
    %v1322 = vshrl.u32 %v1321, 7
    %v1323 = vsub.s32 0, %v1322
    %v1324 = vrot.slane %v1319, %v1323
    %v1330 = vunpack.c.l.b16 %v1313
    %v1331 = vunpack.c.l.b16 %v1314
    %v1332 = vunpack.c.l.b16 %v1315
    %v1333 = vunpack.c.l.b16 %v1316
    %v1334 = vpack.c.b16 %v1331, %v1330
    %v1335 = vpack.c.b16 %v1333, %v1332
    %v1339 = vsel %vm226, %v1317, 0
    %1341 = vmatprep.subr.bf16.mxu0 0
    %1342 = vmatpush1.bf16.msra.mxu0 %v1334
    %1343 = vmatprep.subr.bf16.mxu0 0
    %1344 = vmatpush1.bf16.msra.mxu0 %v1335
    %1345 = vmatprep.subr.bf16.mxu0 0
    %1346 = vmatpush1.bf16.msra.mxu0 0
    %1347 = vmatprep.subr.bf16.mxu0 0
    %1348 = vmatpush1.bf16.msra.mxu0 0
    %1349 = vmatprep.subr.bf16.mxu0 0
    %1350 = vmatpush1.bf16.msra.mxu0 0
    %1351 = vmatprep.subr.bf16.mxu0 0
    %1352 = vmatpush1.bf16.msra.mxu0 0
    %1353 = vmatprep.subr.bf16.mxu0 0
    %1354 = vmatpush1.bf16.msra.mxu0 0
    %1355 = vmatprep.subr.bf16.mxu0 0
    %1356 = vmatpush1.bf16.msra.mxu0 0
    %1357 = vmatprep.subr.bf16.mxu0 0
    %1358 = vmatpush1.bf16.msra.mxu0 0
    %1359 = vmatprep.subr.bf16.mxu0 0
    %1360 = vmatpush1.bf16.msra.mxu0 0
    %1361 = vmatprep.subr.bf16.mxu0 0
    %1362 = vmatpush1.bf16.msra.mxu0 0
    %1363 = vmatprep.subr.bf16.mxu0 0
    %1364 = vmatpush1.bf16.msra.mxu0 0
    %1365 = vmatprep.subr.bf16.mxu0 0
    %1366 = vmatpush1.bf16.msra.mxu0 0
    %1367 = vmatprep.subr.bf16.mxu0 0
    %1368 = vmatpush1.bf16.msra.mxu0 0
    %1369 = vmatprep.subr.bf16.mxu0 0
    %1370 = vmatpush1.bf16.msra.mxu0 0
    %1371 = vmatprep.subr.bf16.mxu0 0
    %1372 = vmatpush1.bf16.msra.mxu0 0
    %1373 = vmatprep.mubr.bf16.mxu0 0
    %1374 = vmatmul.mubr.bf16.gmra.mrb[0].mxu0 %v1339
    %v1375 = vpop.f32.mrb[0].mxu0
    %v1376 = vadd.f32 %v1324, %v1375
    %v1377 = vpop.f32.mrb[0].mxu0
    %v1378 = vpop.f32.mrb[0].mxu0
    %v1379 = vadd.f32 %v1324, %v1378
    %v1380 = vpop.f32.mrb[0].mxu0
    %1381 = vdwg.mxu0
    %1384 = vrot.lane.b32.xlu0 %v1376, 120
    %v1385 = vpop.permute.xlu0 %1384
    %1386 = vrot.lane.b32.xlu0 %v1379, 120
    %v1387 = vpop.permute.xlu0 %1386
    %1390 = vrot.lane.b32.xlu0 %v1376, 112
    %v1391 = vpop.permute.xlu0 %1390
    %1392 = vrot.lane.b32.xlu0 %v1379, 112
    %v1393 = vpop.permute.xlu0 %1392
    %1396 = vrot.lane.b32.xlu0 %v1376, 104
    %v1397 = vpop.permute.xlu0 %1396
    %1398 = vrot.lane.b32.xlu0 %v1379, 104
    %v1399 = vpop.permute.xlu0 %1398
    %v1402 = vpack.c.bf16 %v1379, %v1376
    %v1403 = vpack.c.bf16 %v1387, %v1385
    %v1404 = vpack.c.bf16 %v1393, %v1391
    %v1405 = vpack.c.bf16 %v1399, %v1397
    %1407 = vrot.lane.b32.xlu0 %v1402, 96
    %v1408 = vpop.permute.xlu0 %1407
    %v1410 = vsel %vm412, %v1402, 0
    %v1413 = vsel %vm412, %v1408, 0
    %1415 = vmatprep.subr.bf16.mxu0 0
    %1416 = vmatpush1.bf16.xpose.msra.mxu0 %v1413
    %1417 = vmatprep.subr.bf16.mxu0 0
    %1418 = vmatpush1.bf16.xpose.msra.mxu0 0
    %1419 = vmatprep.subr.bf16.mxu0 0
    %1420 = vmatpush1.bf16.xpose.msra.mxu0 0
    %1421 = vmatprep.subr.bf16.mxu0 0
    %1422 = vmatpush1.bf16.xpose.msra.mxu0 0
    %1423 = vmatprep.subr.bf16.mxu0 0
    %1424 = vmatpush1.bf16.xpose.msra.mxu0 0
    %1425 = vmatprep.subr.bf16.mxu0 0
    %1426 = vmatpush1.bf16.xpose.msra.mxu0 0
    %1427 = vmatprep.subr.bf16.mxu0 0
    %1428 = vmatpush1.bf16.xpose.msra.mxu0 0
    %1429 = vmatprep.subr.bf16.mxu0 0
    %1430 = vmatpush1.bf16.xpose.msra.mxu0 0
    %1431 = vmatprep.subr.bf16.mxu0 0
    %1432 = vmatpush1.bf16.xpose.msra.mxu0 0
    %1433 = vmatprep.subr.bf16.mxu0 0
    %1434 = vmatpush1.bf16.xpose.msra.mxu0 0
    %1435 = vmatprep.subr.bf16.mxu0 0
    %1436 = vmatpush1.bf16.xpose.msra.mxu0 0
    %1437 = vmatprep.subr.bf16.mxu0 0
    %1438 = vmatpush1.bf16.xpose.msra.mxu0 0
    %1439 = vmatprep.subr.bf16.mxu0 0
    %1440 = vmatpush1.bf16.xpose.msra.mxu0 0
    %1441 = vmatprep.subr.bf16.mxu0 0
    %1442 = vmatpush1.bf16.xpose.msra.mxu0 0
    %1443 = vmatprep.subr.bf16.mxu0 0
    %1444 = vmatpush1.bf16.xpose.msra.mxu0 0
    %1445 = vmatprep.subr.bf16.mxu0 0
    %1446 = vmatpush1.bf16.xpose.msra.mxu0 0
    %1447 = vmatprep.mubr.bf16.mxu0 0
    %1448 = vmatmul.mubr.bf16.gmra.mrb[0].mxu0 %v1410
    %v1449 = vpop.f32.mrb[0].mxu0
    %v1450 = vadd.f32 0.0, %v1449
    %v1451 = vpop.f32.mrb[0].mxu0
    %v1452 = vpop.f32.mrb[0].mxu0
    %v1453 = vadd.f32 0.0, %v1452
    %v1454 = vpop.f32.mrb[0].mxu0
    %1455 = vdwg.mxu0
    %1457 = vrot.lane.b32.xlu0 %v1403, 96
    %v1458 = vpop.permute.xlu0 %1457
    %v1460 = vsel %vm412, %v1403, 0
    %v1463 = vsel %vm412, %v1458, 0
    %1465 = vmatprep.subr.bf16.mxu0 0
    %1466 = vmatpush1.bf16.xpose.msra.mxu0 %v1463
    %1467 = vmatprep.subr.bf16.mxu0 0
    %1468 = vmatpush1.bf16.xpose.msra.mxu0 0
    %1469 = vmatprep.subr.bf16.mxu0 0
    %1470 = vmatpush1.bf16.xpose.msra.mxu0 0
    %1471 = vmatprep.subr.bf16.mxu0 0
    %1472 = vmatpush1.bf16.xpose.msra.mxu0 0
    %1473 = vmatprep.subr.bf16.mxu0 0
    %1474 = vmatpush1.bf16.xpose.msra.mxu0 0
    %1475 = vmatprep.subr.bf16.mxu0 0
    %1476 = vmatpush1.bf16.xpose.msra.mxu0 0
    %1477 = vmatprep.subr.bf16.mxu0 0
    %1478 = vmatpush1.bf16.xpose.msra.mxu0 0
    %1479 = vmatprep.subr.bf16.mxu0 0
    %1480 = vmatpush1.bf16.xpose.msra.mxu0 0
    %1481 = vmatprep.subr.bf16.mxu0 0
    %1482 = vmatpush1.bf16.xpose.msra.mxu0 0
    %1483 = vmatprep.subr.bf16.mxu0 0
    %1484 = vmatpush1.bf16.xpose.msra.mxu0 0
    %1485 = vmatprep.subr.bf16.mxu0 0
    %1486 = vmatpush1.bf16.xpose.msra.mxu0 0
    %1487 = vmatprep.subr.bf16.mxu0 0
    %1488 = vmatpush1.bf16.xpose.msra.mxu0 0
    %1489 = vmatprep.subr.bf16.mxu0 0
    %1490 = vmatpush1.bf16.xpose.msra.mxu0 0
    %1491 = vmatprep.subr.bf16.mxu0 0
    %1492 = vmatpush1.bf16.xpose.msra.mxu0 0
    %1493 = vmatprep.subr.bf16.mxu0 0
    %1494 = vmatpush1.bf16.xpose.msra.mxu0 0
    %1495 = vmatprep.subr.bf16.mxu0 0
    %1496 = vmatpush1.bf16.xpose.msra.mxu0 0
    %1497 = vmatprep.mubr.bf16.mxu0 0
    %1498 = vmatmul.mubr.bf16.gmra.mrb[0].mxu0 %v1460
    %v1499 = vpop.f32.mrb[0].mxu0
    %v1500 = vadd.f32 0.0, %v1499
    %v1501 = vpop.f32.mrb[0].mxu0
    %v1502 = vpop.f32.mrb[0].mxu0
    %v1503 = vadd.f32 0.0, %v1502
    %v1504 = vpop.f32.mrb[0].mxu0
    %1505 = vdwg.mxu0
    %1507 = vrot.lane.b32.xlu0 %v1404, 96
    %v1508 = vpop.permute.xlu0 %1507
    %v1510 = vsel %vm412, %v1404, 0
    %v1513 = vsel %vm412, %v1508, 0
    %1515 = vmatprep.subr.bf16.mxu0 0
    %1516 = vmatpush1.bf16.xpose.msra.mxu0 %v1513
    %1517 = vmatprep.subr.bf16.mxu0 0
    %1518 = vmatpush1.bf16.xpose.msra.mxu0 0
    %1519 = vmatprep.subr.bf16.mxu0 0
    %1520 = vmatpush1.bf16.xpose.msra.mxu0 0
    %1521 = vmatprep.subr.bf16.mxu0 0
    %1522 = vmatpush1.bf16.xpose.msra.mxu0 0
    %1523 = vmatprep.subr.bf16.mxu0 0
    %1524 = vmatpush1.bf16.xpose.msra.mxu0 0
    %1525 = vmatprep.subr.bf16.mxu0 0
    %1526 = vmatpush1.bf16.xpose.msra.mxu0 0
    %1527 = vmatprep.subr.bf16.mxu0 0
    %1528 = vmatpush1.bf16.xpose.msra.mxu0 0
    %1529 = vmatprep.subr.bf16.mxu0 0
    %1530 = vmatpush1.bf16.xpose.msra.mxu0 0
    %1531 = vmatprep.subr.bf16.mxu0 0
    %1532 = vmatpush1.bf16.xpose.msra.mxu0 0
    %1533 = vmatprep.subr.bf16.mxu0 0
    %1534 = vmatpush1.bf16.xpose.msra.mxu0 0
    %1535 = vmatprep.subr.bf16.mxu0 0
    %1536 = vmatpush1.bf16.xpose.msra.mxu0 0
    %1537 = vmatprep.subr.bf16.mxu0 0
    %1538 = vmatpush1.bf16.xpose.msra.mxu0 0
    %1539 = vmatprep.subr.bf16.mxu0 0
    %1540 = vmatpush1.bf16.xpose.msra.mxu0 0
    %1541 = vmatprep.subr.bf16.mxu0 0
    %1542 = vmatpush1.bf16.xpose.msra.mxu0 0
    %1543 = vmatprep.subr.bf16.mxu0 0
    %1544 = vmatpush1.bf16.xpose.msra.mxu0 0
    %1545 = vmatprep.subr.bf16.mxu0 0
    %1546 = vmatpush1.bf16.xpose.msra.mxu0 0
    %1547 = vmatprep.mubr.bf16.mxu0 0
    %1548 = vmatmul.mubr.bf16.gmra.mrb[0].mxu0 %v1510
    %v1549 = vpop.f32.mrb[0].mxu0
    %v1550 = vadd.f32 0.0, %v1549
    %v1551 = vpop.f32.mrb[0].mxu0
    %v1552 = vpop.f32.mrb[0].mxu0
    %v1553 = vadd.f32 0.0, %v1552
    %v1554 = vpop.f32.mrb[0].mxu0
    %1555 = vdwg.mxu0
    %1557 = vrot.lane.b32.xlu0 %v1405, 96
    %v1558 = vpop.permute.xlu0 %1557
    %v1560 = vsel %vm412, %v1405, 0
    %v1563 = vsel %vm412, %v1558, 0
    %1565 = vmatprep.subr.bf16.mxu0 0
    %1566 = vmatpush1.bf16.xpose.msra.mxu0 %v1563
    %1567 = vmatprep.subr.bf16.mxu0 0
    %1568 = vmatpush1.bf16.xpose.msra.mxu0 0
    %1569 = vmatprep.subr.bf16.mxu0 0
    %1570 = vmatpush1.bf16.xpose.msra.mxu0 0
    %1571 = vmatprep.subr.bf16.mxu0 0
    %1572 = vmatpush1.bf16.xpose.msra.mxu0 0
    %1573 = vmatprep.subr.bf16.mxu0 0
    %1574 = vmatpush1.bf16.xpose.msra.mxu0 0
    %1575 = vmatprep.subr.bf16.mxu0 0
    %1576 = vmatpush1.bf16.xpose.msra.mxu0 0
    %1577 = vmatprep.subr.bf16.mxu0 0
    %1578 = vmatpush1.bf16.xpose.msra.mxu0 0
    %1579 = vmatprep.subr.bf16.mxu0 0
    %1580 = vmatpush1.bf16.xpose.msra.mxu0 0
    %1581 = vmatprep.subr.bf16.mxu0 0
    %1582 = vmatpush1.bf16.xpose.msra.mxu0 0
    %1583 = vmatprep.subr.bf16.mxu0 0
    %1584 = vmatpush1.bf16.xpose.msra.mxu0 0
    %1585 = vmatprep.subr.bf16.mxu0 0
    %1586 = vmatpush1.bf16.xpose.msra.mxu0 0
    %1587 = vmatprep.subr.bf16.mxu0 0
    %1588 = vmatpush1.bf16.xpose.msra.mxu0 0
    %1589 = vmatprep.subr.bf16.mxu0 0
    %1590 = vmatpush1.bf16.xpose.msra.mxu0 0
    %1591 = vmatprep.subr.bf16.mxu0 0
    %1592 = vmatpush1.bf16.xpose.msra.mxu0 0
    %1593 = vmatprep.subr.bf16.mxu0 0
    %1594 = vmatpush1.bf16.xpose.msra.mxu0 0
    %1595 = vmatprep.subr.bf16.mxu0 0
    %1596 = vmatpush1.bf16.xpose.msra.mxu0 0
    %1597 = vmatprep.mubr.bf16.mxu0 0
    %1598 = vmatmul.mubr.bf16.gmra.mrb[0].mxu0 %v1560
    %v1599 = vpop.f32.mrb[0].mxu0
    %v1600 = vadd.f32 0.0, %v1599
    %v1601 = vpop.f32.mrb[0].mxu0
    %v1602 = vpop.f32.mrb[0].mxu0
    %v1603 = vadd.f32 0.0, %v1602
    %v1604 = vpop.f32.mrb[0].mxu0
    %1605 = vdwg.mxu0
    %v1606 = vmul.f32 %v1450, 0.35355338
    %v1607 = vmul.f32 %v1453, 0.35355338
    %v1608 = vmul.f32 %v1500, 0.35355338
    %v1609 = vmul.f32 %v1503, 0.35355338
    %v1610 = vmul.f32 %v1550, 0.35355338
    %v1611 = vmul.f32 %v1553, 0.35355338
    %v1612 = vmul.f32 %v1600, 0.35355338
    %v1613 = vmul.f32 %v1603, 0.35355338
    %v1614 = vadd.f32 %v1606, %v271
    %v1615 = vadd.f32 %v1607, %v272
    %v1616 = vadd.f32 %v1608, %v271
    %v1617 = vadd.f32 %v1609, %v272
    %v1618 = vadd.f32 %v1610, %v271
    %v1619 = vadd.f32 %v1611, %v272
    %v1620 = vadd.f32 %v1612, %v271
    %v1621 = vadd.f32 %v1613, %v272
    %v1622 = vsel %vm626, %v1614, -inf
    %1623 = vmax.xlane.f32.xlu0 %v1622
    %v1624 = vpop.xlane.xlu0 %1623
    %v1625 = vsel %vm630, %v1615, -inf
    %1626 = vmax.xlane.f32.xlu0 %v1625
    %v1627 = vpop.xlane.xlu0 %1626
    %v1628 = vsel %vm626, %v1616, -inf
    %1629 = vmax.xlane.f32.xlu0 %v1628
    %v1630 = vpop.xlane.xlu0 %1629
    %v1631 = vsel %vm630, %v1617, -inf
    %1632 = vmax.xlane.f32.xlu0 %v1631
    %v1633 = vpop.xlane.xlu0 %1632
    %v1634 = vsel %vm626, %v1618, -inf
    %1635 = vmax.xlane.f32.xlu0 %v1634
    %v1636 = vpop.xlane.xlu0 %1635
    %v1637 = vsel %vm630, %v1619, -inf
    %1638 = vmax.xlane.f32.xlu0 %v1637
    %v1639 = vpop.xlane.xlu0 %1638
    %v1640 = vsel %vm626, %v1620, -inf
    %1641 = vmax.xlane.f32.xlu0 %v1640
    %v1642 = vpop.xlane.xlu0 %1641
    %v1643 = vsel %vm630, %v1621, -inf
    %1644 = vmax.xlane.f32.xlu0 %v1643
    %v1645 = vpop.xlane.xlu0 %1644
    %v1646 = vsub.f32 %v1614, %v1624
    %v1647 = vsub.f32 %v1615, %v1627
    %v1648 = vsub.f32 %v1616, %v1630
    %v1649 = vsub.f32 %v1617, %v1633
    %v1650 = vsub.f32 %v1618, %v1636
    %v1651 = vsub.f32 %v1619, %v1639
    %v1652 = vsub.f32 %v1620, %v1642
    %v1653 = vsub.f32 %v1621, %v1645
    %v1654 = vmul.f32 %v1646, 1.442695
    %v1655 = vpow.pop %v1654
    %v1656 = vmul.f32 %v1647, 1.442695
    %v1657 = vpow.pop %v1656
    %v1658 = vmul.f32 %v1648, 1.442695
    %v1659 = vpow.pop %v1658
    %v1660 = vmul.f32 %v1649, 1.442695
    %v1661 = vpow.pop %v1660
    %v1662 = vmul.f32 %v1650, 1.442695
    %v1663 = vpow.pop %v1662
    %v1664 = vmul.f32 %v1651, 1.442695
    %v1665 = vpow.pop %v1664
    %v1666 = vmul.f32 %v1652, 1.442695
    %v1667 = vpow.pop %v1666
    %v1668 = vmul.f32 %v1653, 1.442695
    %v1669 = vpow.pop %v1668
    %v1670 = vsel %vm626, %v1655, 0.0
    %1671 = vadd.xlane.f32.xlu0 %v1670
    %v1672 = vpop.xlane.xlu0 %1671
    %v1673 = vsel %vm630, %v1657, 0.0
    %1674 = vadd.xlane.f32.xlu0 %v1673
    %v1675 = vpop.xlane.xlu0 %1674
    %v1676 = vsel %vm626, %v1659, 0.0
    %1677 = vadd.xlane.f32.xlu0 %v1676
    %v1678 = vpop.xlane.xlu0 %1677
    %v1679 = vsel %vm630, %v1661, 0.0
    %1680 = vadd.xlane.f32.xlu0 %v1679
    %v1681 = vpop.xlane.xlu0 %1680
    %v1682 = vsel %vm626, %v1663, 0.0
    %1683 = vadd.xlane.f32.xlu0 %v1682
    %v1684 = vpop.xlane.xlu0 %1683
    %v1685 = vsel %vm630, %v1665, 0.0
    %1686 = vadd.xlane.f32.xlu0 %v1685
    %v1687 = vpop.xlane.xlu0 %1686
    %v1688 = vsel %vm626, %v1667, 0.0
    %1689 = vadd.xlane.f32.xlu0 %v1688
    %v1690 = vpop.xlane.xlu0 %1689
    %v1691 = vsel %vm630, %v1669, 0.0
    %1692 = vadd.xlane.f32.xlu0 %v1691
    %v1693 = vpop.xlane.xlu0 %1692
    %v1694 = vrcp.pop %v1672
    %v1695 = vrcp.pop %v1675
    %v1696 = vrcp.pop %v1678
    %v1697 = vrcp.pop %v1681
    %v1698 = vrcp.pop %v1684
    %v1699 = vrcp.pop %v1687
    %v1700 = vrcp.pop %v1690
    %v1701 = vrcp.pop %v1693
    %v1702 = vmul.f32 %v1655, %v1694
    %v1703 = vmul.f32 %v1657, %v1695
    %v1704 = vmul.f32 %v1659, %v1696
    %v1705 = vmul.f32 %v1661, %v1697
    %v1706 = vmul.f32 %v1663, %v1698
    %v1707 = vmul.f32 %v1665, %v1699
    %v1708 = vmul.f32 %v1667, %v1700
    %v1709 = vmul.f32 %v1669, %v1701
    %v1710 = vpack.c.bf16 %v1703, %v1702
    %v1711 = vpack.c.bf16 %v1705, %v1704
    %v1712 = vpack.c.bf16 %v1707, %v1706
    %v1713 = vpack.c.bf16 %v1709, %v1708
    %1714 = vrot.lane.b32.xlu0 %v1402, 64
    %v1715 = vpop.permute.xlu0 %1714
    %v1717 = vsel %vm626, %v1710, 0
    %v1720 = vsel %vm725, %v1715, 0
    %1722 = vmatprep.subr.bf16.mxu0 0
    %1723 = vmatpush1.bf16.msra.mxu0 %v1720
    %1724 = vmatprep.subr.bf16.mxu0 0
    %1725 = vmatpush1.bf16.msra.mxu0 0
    %1726 = vmatprep.subr.bf16.mxu0 0
    %1727 = vmatpush1.bf16.msra.mxu0 0
    %1728 = vmatprep.subr.bf16.mxu0 0
    %1729 = vmatpush1.bf16.msra.mxu0 0
    %1730 = vmatprep.subr.bf16.mxu0 0
    %1731 = vmatpush1.bf16.msra.mxu0 0
    %1732 = vmatprep.subr.bf16.mxu0 0
    %1733 = vmatpush1.bf16.msra.mxu0 0
    %1734 = vmatprep.subr.bf16.mxu0 0
    %1735 = vmatpush1.bf16.msra.mxu0 0
    %1736 = vmatprep.subr.bf16.mxu0 0
    %1737 = vmatpush1.bf16.msra.mxu0 0
    %1738 = vmatprep.subr.bf16.mxu0 0
    %1739 = vmatpush1.bf16.msra.mxu0 0
    %1740 = vmatprep.subr.bf16.mxu0 0
    %1741 = vmatpush1.bf16.msra.mxu0 0
    %1742 = vmatprep.subr.bf16.mxu0 0
    %1743 = vmatpush1.bf16.msra.mxu0 0
    %1744 = vmatprep.subr.bf16.mxu0 0
    %1745 = vmatpush1.bf16.msra.mxu0 0
    %1746 = vmatprep.subr.bf16.mxu0 0
    %1747 = vmatpush1.bf16.msra.mxu0 0
    %1748 = vmatprep.subr.bf16.mxu0 0
    %1749 = vmatpush1.bf16.msra.mxu0 0
    %1750 = vmatprep.subr.bf16.mxu0 0
    %1751 = vmatpush1.bf16.msra.mxu0 0
    %1752 = vmatprep.subr.bf16.mxu0 0
    %1753 = vmatpush1.bf16.msra.mxu0 0
    %1754 = vmatprep.mubr.bf16.mxu0 0
    %1755 = vmatmul.mubr.bf16.gmra.mrb[0].mxu0 %v1717
    %v1756 = vpop.f32.mrb[0].mxu0
    %v1757 = vadd.f32 0.0, %v1756
    %v1758 = vpop.f32.mrb[0].mxu0
    %v1759 = vpop.f32.mrb[0].mxu0
    %v1760 = vadd.f32 0.0, %v1759
    %v1761 = vpop.f32.mrb[0].mxu0
    %1762 = vdwg.mxu0
    %1763 = vrot.lane.b32.xlu0 %v1403, 64
    %v1764 = vpop.permute.xlu0 %1763
    %v1766 = vsel %vm626, %v1711, 0
    %v1769 = vsel %vm725, %v1764, 0
    %1771 = vmatprep.subr.bf16.mxu0 0
    %1772 = vmatpush1.bf16.msra.mxu0 %v1769
    %1773 = vmatprep.subr.bf16.mxu0 0
    %1774 = vmatpush1.bf16.msra.mxu0 0
    %1775 = vmatprep.subr.bf16.mxu0 0
    %1776 = vmatpush1.bf16.msra.mxu0 0
    %1777 = vmatprep.subr.bf16.mxu0 0
    %1778 = vmatpush1.bf16.msra.mxu0 0
    %1779 = vmatprep.subr.bf16.mxu0 0
    %1780 = vmatpush1.bf16.msra.mxu0 0
    %1781 = vmatprep.subr.bf16.mxu0 0
    %1782 = vmatpush1.bf16.msra.mxu0 0
    %1783 = vmatprep.subr.bf16.mxu0 0
    %1784 = vmatpush1.bf16.msra.mxu0 0
    %1785 = vmatprep.subr.bf16.mxu0 0
    %1786 = vmatpush1.bf16.msra.mxu0 0
    %1787 = vmatprep.subr.bf16.mxu0 0
    %1788 = vmatpush1.bf16.msra.mxu0 0
    %1789 = vmatprep.subr.bf16.mxu0 0
    %1790 = vmatpush1.bf16.msra.mxu0 0
    %1791 = vmatprep.subr.bf16.mxu0 0
    %1792 = vmatpush1.bf16.msra.mxu0 0
    %1793 = vmatprep.subr.bf16.mxu0 0
    %1794 = vmatpush1.bf16.msra.mxu0 0
    %1795 = vmatprep.subr.bf16.mxu0 0
    %1796 = vmatpush1.bf16.msra.mxu0 0
    %1797 = vmatprep.subr.bf16.mxu0 0
    %1798 = vmatpush1.bf16.msra.mxu0 0
    %1799 = vmatprep.subr.bf16.mxu0 0
    %1800 = vmatpush1.bf16.msra.mxu0 0
    %1801 = vmatprep.subr.bf16.mxu0 0
    %1802 = vmatpush1.bf16.msra.mxu0 0
    %1803 = vmatprep.mubr.bf16.mxu0 0
    %1804 = vmatmul.mubr.bf16.gmra.mrb[0].mxu0 %v1766
    %v1805 = vpop.f32.mrb[0].mxu0
    %v1806 = vadd.f32 0.0, %v1805
    %v1807 = vpop.f32.mrb[0].mxu0
    %v1808 = vpop.f32.mrb[0].mxu0
    %v1809 = vadd.f32 0.0, %v1808
    %v1810 = vpop.f32.mrb[0].mxu0
    %1811 = vdwg.mxu0
    %1812 = vrot.lane.b32.xlu0 %v1404, 64
    %v1813 = vpop.permute.xlu0 %1812
    %v1815 = vsel %vm626, %v1712, 0
    %v1818 = vsel %vm725, %v1813, 0
    %1820 = vmatprep.subr.bf16.mxu0 0
    %1821 = vmatpush1.bf16.msra.mxu0 %v1818
    %1822 = vmatprep.subr.bf16.mxu0 0
    %1823 = vmatpush1.bf16.msra.mxu0 0
    %1824 = vmatprep.subr.bf16.mxu0 0
    %1825 = vmatpush1.bf16.msra.mxu0 0
    %1826 = vmatprep.subr.bf16.mxu0 0
    %1827 = vmatpush1.bf16.msra.mxu0 0
    %1828 = vmatprep.subr.bf16.mxu0 0
    %1829 = vmatpush1.bf16.msra.mxu0 0
    %1830 = vmatprep.subr.bf16.mxu0 0
    %1831 = vmatpush1.bf16.msra.mxu0 0
    %1832 = vmatprep.subr.bf16.mxu0 0
    %1833 = vmatpush1.bf16.msra.mxu0 0
    %1834 = vmatprep.subr.bf16.mxu0 0
    %1835 = vmatpush1.bf16.msra.mxu0 0
    %1836 = vmatprep.subr.bf16.mxu0 0
    %1837 = vmatpush1.bf16.msra.mxu0 0
    %1838 = vmatprep.subr.bf16.mxu0 0
    %1839 = vmatpush1.bf16.msra.mxu0 0
    %1840 = vmatprep.subr.bf16.mxu0 0
    %1841 = vmatpush1.bf16.msra.mxu0 0
    %1842 = vmatprep.subr.bf16.mxu0 0
    %1843 = vmatpush1.bf16.msra.mxu0 0
    %1844 = vmatprep.subr.bf16.mxu0 0
    %1845 = vmatpush1.bf16.msra.mxu0 0
    %1846 = vmatprep.subr.bf16.mxu0 0
    %1847 = vmatpush1.bf16.msra.mxu0 0
    %1848 = vmatprep.subr.bf16.mxu0 0
    %1849 = vmatpush1.bf16.msra.mxu0 0
    %1850 = vmatprep.subr.bf16.mxu0 0
    %1851 = vmatpush1.bf16.msra.mxu0 0
    %1852 = vmatprep.mubr.bf16.mxu0 0
    %1853 = vmatmul.mubr.bf16.gmra.mrb[0].mxu0 %v1815
    %v1854 = vpop.f32.mrb[0].mxu0
    %v1855 = vadd.f32 0.0, %v1854
    %v1856 = vpop.f32.mrb[0].mxu0
    %v1857 = vpop.f32.mrb[0].mxu0
    %v1858 = vadd.f32 0.0, %v1857
    %v1859 = vpop.f32.mrb[0].mxu0
    %1860 = vdwg.mxu0
    %1861 = vrot.lane.b32.xlu0 %v1405, 64
    %v1862 = vpop.permute.xlu0 %1861
    %v1864 = vsel %vm626, %v1713, 0
    %v1867 = vsel %vm725, %v1862, 0
    %1869 = vmatprep.subr.bf16.mxu0 0
    %1870 = vmatpush1.bf16.msra.mxu0 %v1867
    %1871 = vmatprep.subr.bf16.mxu0 0
    %1872 = vmatpush1.bf16.msra.mxu0 0
    %1873 = vmatprep.subr.bf16.mxu0 0
    %1874 = vmatpush1.bf16.msra.mxu0 0
    %1875 = vmatprep.subr.bf16.mxu0 0
    %1876 = vmatpush1.bf16.msra.mxu0 0
    %1877 = vmatprep.subr.bf16.mxu0 0
    %1878 = vmatpush1.bf16.msra.mxu0 0
    %1879 = vmatprep.subr.bf16.mxu0 0
    %1880 = vmatpush1.bf16.msra.mxu0 0
    %1881 = vmatprep.subr.bf16.mxu0 0
    %1882 = vmatpush1.bf16.msra.mxu0 0
    %1883 = vmatprep.subr.bf16.mxu0 0
    %1884 = vmatpush1.bf16.msra.mxu0 0
    %1885 = vmatprep.subr.bf16.mxu0 0
    %1886 = vmatpush1.bf16.msra.mxu0 0
    %1887 = vmatprep.subr.bf16.mxu0 0
    %1888 = vmatpush1.bf16.msra.mxu0 0
    %1889 = vmatprep.subr.bf16.mxu0 0
    %1890 = vmatpush1.bf16.msra.mxu0 0
    %1891 = vmatprep.subr.bf16.mxu0 0
    %1892 = vmatpush1.bf16.msra.mxu0 0
    %1893 = vmatprep.subr.bf16.mxu0 0
    %1894 = vmatpush1.bf16.msra.mxu0 0
    %1895 = vmatprep.subr.bf16.mxu0 0
    %1896 = vmatpush1.bf16.msra.mxu0 0
    %1897 = vmatprep.subr.bf16.mxu0 0
    %1898 = vmatpush1.bf16.msra.mxu0 0
    %1899 = vmatprep.subr.bf16.mxu0 0
    %1900 = vmatpush1.bf16.msra.mxu0 0
    %1901 = vmatprep.mubr.bf16.mxu0 0
    %1902 = vmatmul.mubr.bf16.gmra.mrb[0].mxu0 %v1864
    %v1903 = vpop.f32.mrb[0].mxu0
    %v1904 = vadd.f32 0.0, %v1903
    %v1905 = vpop.f32.mrb[0].mxu0
    %v1906 = vpop.f32.mrb[0].mxu0
    %v1907 = vadd.f32 0.0, %v1906
    %v1908 = vpop.f32.mrb[0].mxu0
    %1909 = vdwg.mxu0
    %1912 = vrot.lane.b32.xlu0 %v1806, 8
    %v1913 = vpop.permute.xlu0 %1912
    %1914 = vrot.lane.b32.xlu0 %v1809, 8
    %v1915 = vpop.permute.xlu0 %1914
    %1920 = vrot.lane.b32.xlu0 %v1855, 16
    %v1921 = vpop.permute.xlu0 %1920
    %1922 = vrot.lane.b32.xlu0 %v1858, 16
    %v1923 = vpop.permute.xlu0 %1922
    %1928 = vrot.lane.b32.xlu0 %v1904, 24
    %v1929 = vpop.permute.xlu0 %1928
    %1930 = vrot.lane.b32.xlu0 %v1907, 24
    %v1931 = vpop.permute.xlu0 %1930
    %v1934 = vsel %vm412, %v1757, %v1913
    %v1935 = vsel %vm412, %v1760, %v1915
    %v1936 = vsel %vm943, %v1934, %v1921
    %v1937 = vsel %vm943, %v1935, %v1923
    %v1938 = vsel %vm946, %v1936, %v1929
    %v1939 = vsel %vm946, %v1937, %v1931
    %s1940 = scalar_lea.vmem %s10, 16
    %v1941 = vld [vmem:[%s1940] sm:$0xf]
    %v1942 = vld [vmem:[%s1940 + $0x4] sm:$0xf]
    %v1943 = vld [vmem:[%s1940 + $0x8] sm:$0xf]
    %v1944 = vld [vmem:[%s1940 + $0xc] sm:$0xf]
    %v1945 = vpack.c.bf16 %v1939, %v1938
    %v1950 = vunpack.c.l.b16 %v1941
    %v1951 = vunpack.c.l.b16 %v1942
    %v1952 = vunpack.c.l.b16 %v1943
    %v1953 = vunpack.c.l.b16 %v1944
    %v1954 = vpack.c.b16 %v1951, %v1950
    %v1955 = vpack.c.b16 %v1953, %v1952
    %v1959 = vsel %vm226, %v1945, 0
    %1961 = vmatprep.subr.bf16.mxu0 0
    %1962 = vmatpush1.bf16.msra.mxu0 %v1954
    %1963 = vmatprep.subr.bf16.mxu0 0
    %1964 = vmatpush1.bf16.msra.mxu0 %v1955
    %1965 = vmatprep.subr.bf16.mxu0 0
    %1966 = vmatpush1.bf16.msra.mxu0 0
    %1967 = vmatprep.subr.bf16.mxu0 0
    %1968 = vmatpush1.bf16.msra.mxu0 0
    %1969 = vmatprep.subr.bf16.mxu0 0
    %1970 = vmatpush1.bf16.msra.mxu0 0
    %1971 = vmatprep.subr.bf16.mxu0 0
    %1972 = vmatpush1.bf16.msra.mxu0 0
    %1973 = vmatprep.subr.bf16.mxu0 0
    %1974 = vmatpush1.bf16.msra.mxu0 0
    %1975 = vmatprep.subr.bf16.mxu0 0
    %1976 = vmatpush1.bf16.msra.mxu0 0
    %1977 = vmatprep.subr.bf16.mxu0 0
    %1978 = vmatpush1.bf16.msra.mxu0 0
    %1979 = vmatprep.subr.bf16.mxu0 0
    %1980 = vmatpush1.bf16.msra.mxu0 0
    %1981 = vmatprep.subr.bf16.mxu0 0
    %1982 = vmatpush1.bf16.msra.mxu0 0
    %1983 = vmatprep.subr.bf16.mxu0 0
    %1984 = vmatpush1.bf16.msra.mxu0 0
    %1985 = vmatprep.subr.bf16.mxu0 0
    %1986 = vmatpush1.bf16.msra.mxu0 0
    %1987 = vmatprep.subr.bf16.mxu0 0
    %1988 = vmatpush1.bf16.msra.mxu0 0
    %1989 = vmatprep.subr.bf16.mxu0 0
    %1990 = vmatpush1.bf16.msra.mxu0 0
    %1991 = vmatprep.subr.bf16.mxu0 0
    %1992 = vmatpush1.bf16.msra.mxu0 0
    %1993 = vmatprep.mubr.bf16.mxu0 0
    %1994 = vmatmul.mubr.bf16.gmra.mrb[0].mxu0 %v1959
    %v1995 = vpop.f32.mrb[0].mxu0
    %v1996 = vadd.f32 0.0, %v1995
    %v1997 = vpop.f32.mrb[0].mxu0
    %v1998 = vpop.f32.mrb[0].mxu0
    %v1999 = vadd.f32 0.0, %v1998
    %v2000 = vpop.f32.mrb[0].mxu0
    %2001 = vdwg.mxu0
    %v2002 = vadd.f32 %v1264, %v1996
    %v2003 = vadd.f32 %v1265, %v1999
    %s2004 = scalar_lea.vmem %s11, 1
    %v2005 = vld [vmem:[%s2004] sm:$0x1]
    %v2007 = vlaneseq
    %v2008 = vshrl.u32 %v2007, 7
    %v2009 = vsub.s32 0, %v2008
    %v2010 = vrot.slane %v2005, %v2009
    %v2012 = vadd.f32 %v2002, %v2010
    %v2013 = vadd.f32 %v2003, %v2010
    %s2014 = scalar_lea.vmem %s12, 1
    %v2015 = vld [vmem:[%s2014] sm:$0x1]
    %s2016 = scalar_lea.vmem %s13, 1
    %v2017 = vld [vmem:[%s2016] sm:$0x1]
    %v2018 = vsel %vm226, %v2012, 0.0
    %2019 = vadd.xlane.f32.xlu0 %v2018
    %v2020 = vpop.xlane.xlu0 %2019
    %v2021 = vsel %vm230, %v2013, 0.0
    %2022 = vadd.xlane.f32.xlu0 %v2021
    %v2023 = vpop.xlane.xlu0 %2022
    %v2024 = vmul.f32 %v2020, %v234
    %v2025 = vmul.f32 %v2023, %v234
    %v2026 = vsub.f32 %v2012, %v2024
    %v2027 = vsub.f32 %v2013, %v2025
    %v2028 = vmul.f32 %v2026, %v2026
    %v2029 = vmul.f32 %v2027, %v2027
    %v2030 = vsel %vm226, %v2028, 0.0
    %2031 = vadd.xlane.f32.xlu0 %v2030
    %v2032 = vpop.xlane.xlu0 %2031
    %v2033 = vsel %vm230, %v2029, 0.0
    %2034 = vadd.xlane.f32.xlu0 %v2033
    %v2035 = vpop.xlane.xlu0 %2034
    %v2036 = vmul.f32 %v2032, %v234
    %v2037 = vmul.f32 %v2035, %v234
    %v2038 = vadd.f32 %v2036, 1e-05
    %v2039 = vadd.f32 %v2037, 1e-05
    %v2040 = vrsqrt.pop %v2038
    %v2041 = vrsqrt.pop %v2039
    %v2042 = vmul.f32 %v2026, %v2040
    %v2043 = vmul.f32 %v2027, %v2041
    %v2045 = vlaneseq
    %v2046 = vshrl.u32 %v2045, 7
    %v2047 = vsub.s32 0, %v2046
    %v2048 = vrot.slane %v2015, %v2047
    %v2050 = vmul.f32 %v2042, %v2048
    %v2051 = vmul.f32 %v2043, %v2048
    %v2053 = vlaneseq
    %v2054 = vshrl.u32 %v2053, 7
    %v2055 = vsub.s32 0, %v2054
    %v2056 = vrot.slane %v2017, %v2055
    %v2058 = vadd.f32 %v2050, %v2056
    %v2059 = vadd.f32 %v2051, %v2056
    %s2060 = scalar_lea.vmem %s14, 16
    %v2061 = vld [vmem:[%s2060] sm:$0xf]
    %v2062 = vld [vmem:[%s2060 + $0x4] sm:$0xf]
    %v2063 = vld [vmem:[%s2060 + $0x8] sm:$0xf]
    %v2064 = vld [vmem:[%s2060 + $0xc] sm:$0xf]
    %v2065 = vpack.c.bf16 %v2059, %v2058
    %s2066 = scalar_lea.vmem %s15, 1
    %v2067 = vld [vmem:[%s2066] sm:$0x1]
    %v2069 = vlaneseq
    %v2070 = vshrl.u32 %v2069, 7
    %v2071 = vsub.s32 0, %v2070
    %v2072 = vrot.slane %v2067, %v2071
    %v2078 = vunpack.c.l.b16 %v2061
    %v2079 = vunpack.c.l.b16 %v2062
    %v2080 = vunpack.c.l.b16 %v2063
    %v2081 = vunpack.c.l.b16 %v2064
    %v2082 = vpack.c.b16 %v2079, %v2078
    %v2083 = vpack.c.b16 %v2081, %v2080
    %v2087 = vsel %vm226, %v2065, 0
    %2089 = vmatprep.subr.bf16.mxu0 0
    %2090 = vmatpush1.bf16.msra.mxu0 %v2082
    %2091 = vmatprep.subr.bf16.mxu0 0
    %2092 = vmatpush1.bf16.msra.mxu0 %v2083
    %2093 = vmatprep.subr.bf16.mxu0 0
    %2094 = vmatpush1.bf16.msra.mxu0 0
    %2095 = vmatprep.subr.bf16.mxu0 0
    %2096 = vmatpush1.bf16.msra.mxu0 0
    %2097 = vmatprep.subr.bf16.mxu0 0
    %2098 = vmatpush1.bf16.msra.mxu0 0
    %2099 = vmatprep.subr.bf16.mxu0 0
    %2100 = vmatpush1.bf16.msra.mxu0 0
    %2101 = vmatprep.subr.bf16.mxu0 0
    %2102 = vmatpush1.bf16.msra.mxu0 0
    %2103 = vmatprep.subr.bf16.mxu0 0
    %2104 = vmatpush1.bf16.msra.mxu0 0
    %2105 = vmatprep.subr.bf16.mxu0 0
    %2106 = vmatpush1.bf16.msra.mxu0 0
    %2107 = vmatprep.subr.bf16.mxu0 0
    %2108 = vmatpush1.bf16.msra.mxu0 0
    %2109 = vmatprep.subr.bf16.mxu0 0
    %2110 = vmatpush1.bf16.msra.mxu0 0
    %2111 = vmatprep.subr.bf16.mxu0 0
    %2112 = vmatpush1.bf16.msra.mxu0 0
    %2113 = vmatprep.subr.bf16.mxu0 0
    %2114 = vmatpush1.bf16.msra.mxu0 0
    %2115 = vmatprep.subr.bf16.mxu0 0
    %2116 = vmatpush1.bf16.msra.mxu0 0
    %2117 = vmatprep.subr.bf16.mxu0 0
    %2118 = vmatpush1.bf16.msra.mxu0 0
    %2119 = vmatprep.subr.bf16.mxu0 0
    %2120 = vmatpush1.bf16.msra.mxu0 0
    %2121 = vmatprep.mubr.bf16.mxu0 0
    %2122 = vmatmul.mubr.bf16.gmra.mrb[0].mxu0 %v2087
    %v2123 = vpop.f32.mrb[0].mxu0
    %v2124 = vadd.f32 %v2072, %v2123
    %v2125 = vpop.f32.mrb[0].mxu0
    %v2126 = vpop.f32.mrb[0].mxu0
    %v2127 = vadd.f32 %v2072, %v2126
    %v2128 = vpop.f32.mrb[0].mxu0
    %2129 = vdwg.mxu0
    %v2130 = vmul.f32 %v2124, 1.702
    %v2131 = vmul.f32 %v2127, 1.702
    %v2132 = vxor.u32 %v2130, 2147483648
    %v2133 = vxor.u32 %v2131, 2147483648
    %v2134 = vmul.f32 %v2132, 1.442695
    %v2135 = vpow.pop %v2134
    %v2136 = vmul.f32 %v2133, 1.442695
    %v2137 = vpow.pop %v2136
    %v2138 = vadd.f32 %v2135, 1.0
    %v2139 = vadd.f32 %v2137, 1.0
    %v2140 = vrcp.pop %v2138
    %v2141 = vmul.f32 1.0, %v2140
    %v2142 = vrcp.pop %v2139
    %v2143 = vmul.f32 1.0, %v2142
    %v2144 = vmul.f32 %v2124, %v2141
    %v2145 = vmul.f32 %v2127, %v2143
    %s2146 = scalar_lea.vmem %s16, 64
    %v2147 = vld [vmem:[%s2146] sm:$0xf]
    %v2148 = vld [vmem:[%s2146 + $0x4] sm:$0xf]
    %v2149 = vld [vmem:[%s2146 + $0x8] sm:$0xf]
    %v2150 = vld [vmem:[%s2146 + $0xc] sm:$0xf]
    %v2151 = vld [vmem:[%s2146 + $0x10] sm:$0xf]
    %v2152 = vld [vmem:[%s2146 + $0x14] sm:$0xf]
    %v2153 = vld [vmem:[%s2146 + $0x18] sm:$0xf]
    %v2154 = vld [vmem:[%s2146 + $0x1c] sm:$0xf]
    %v2155 = vld [vmem:[%s2146 + $0x20] sm:$0xf]
    %v2156 = vld [vmem:[%s2146 + $0x24] sm:$0xf]
    %v2157 = vld [vmem:[%s2146 + $0x28] sm:$0xf]
    %v2158 = vld [vmem:[%s2146 + $0x2c] sm:$0xf]
    %v2159 = vld [vmem:[%s2146 + $0x30] sm:$0xf]
    %v2160 = vld [vmem:[%s2146 + $0x34] sm:$0xf]
    %v2161 = vld [vmem:[%s2146 + $0x38] sm:$0xf]
    %v2162 = vld [vmem:[%s2146 + $0x3c] sm:$0xf]
    %v2163 = vpack.c.bf16 %v2145, %v2144
    %v2180 = vunpack.c.l.b16 %v2147
    %v2181 = vunpack.c.l.b16 %v2148
    %v2182 = vunpack.c.l.b16 %v2149
    %v2183 = vunpack.c.l.b16 %v2150
    %v2184 = vunpack.c.l.b16 %v2151
    %v2185 = vunpack.c.l.b16 %v2152
    %v2186 = vunpack.c.l.b16 %v2153
    %v2187 = vunpack.c.l.b16 %v2154
    %v2188 = vunpack.c.l.b16 %v2155
    %v2189 = vunpack.c.l.b16 %v2156
    %v2190 = vunpack.c.l.b16 %v2157
    %v2191 = vunpack.c.l.b16 %v2158
    %v2192 = vunpack.c.l.b16 %v2159
    %v2193 = vunpack.c.l.b16 %v2160
    %v2194 = vunpack.c.l.b16 %v2161
    %v2195 = vunpack.c.l.b16 %v2162
    %v2196 = vpack.c.b16 %v2181, %v2180
    %v2197 = vpack.c.b16 %v2183, %v2182
    %v2198 = vpack.c.b16 %v2185, %v2184
    %v2199 = vpack.c.b16 %v2187, %v2186
    %v2200 = vpack.c.b16 %v2189, %v2188
    %v2201 = vpack.c.b16 %v2191, %v2190
    %v2202 = vpack.c.b16 %v2193, %v2192
    %v2203 = vpack.c.b16 %v2195, %v2194
    %2212 = vmatprep.subr.bf16.mxu0 0
    %2213 = vmatpush1.bf16.msra.mxu0 %v2196
    %2214 = vmatprep.subr.bf16.mxu0 0
    %2215 = vmatpush1.bf16.msra.mxu0 %v2197
    %2216 = vmatprep.subr.bf16.mxu0 0
    %2217 = vmatpush1.bf16.msra.mxu0 %v2198
    %2218 = vmatprep.subr.bf16.mxu0 0
    %2219 = vmatpush1.bf16.msra.mxu0 %v2199
    %2220 = vmatprep.subr.bf16.mxu0 0
    %2221 = vmatpush1.bf16.msra.mxu0 %v2200
    %2222 = vmatprep.subr.bf16.mxu0 0
    %2223 = vmatpush1.bf16.msra.mxu0 %v2201
    %2224 = vmatprep.subr.bf16.mxu0 0
    %2225 = vmatpush1.bf16.msra.mxu0 %v2202
    %2226 = vmatprep.subr.bf16.mxu0 0
    %2227 = vmatpush1.bf16.msra.mxu0 %v2203
    %2228 = vmatprep.subr.bf16.mxu0 0
    %2229 = vmatpush1.bf16.msra.mxu0 0
    %2230 = vmatprep.subr.bf16.mxu0 0
    %2231 = vmatpush1.bf16.msra.mxu0 0
    %2232 = vmatprep.subr.bf16.mxu0 0
    %2233 = vmatpush1.bf16.msra.mxu0 0
    %2234 = vmatprep.subr.bf16.mxu0 0
    %2235 = vmatpush1.bf16.msra.mxu0 0
    %2236 = vmatprep.subr.bf16.mxu0 0
    %2237 = vmatpush1.bf16.msra.mxu0 0
    %2238 = vmatprep.subr.bf16.mxu0 0
    %2239 = vmatpush1.bf16.msra.mxu0 0
    %2240 = vmatprep.subr.bf16.mxu0 0
    %2241 = vmatpush1.bf16.msra.mxu0 0
    %2242 = vmatprep.subr.bf16.mxu0 0
    %2243 = vmatpush1.bf16.msra.mxu0 0
    %2244 = vmatprep.mubr.bf16.mxu0 0
    %2245 = vmatmul.mubr.bf16.gmra.mrb[0].mxu0 %v2163
    %v2246 = vpop.f32.mrb[0].mxu0
    %v2247 = vadd.f32 0.0, %v2246
    %v2248 = vpop.f32.mrb[0].mxu0
    %v2249 = vpop.f32.mrb[0].mxu0
    %v2250 = vpop.f32.mrb[0].mxu0
    %2251 = vdwg.mxu0
    %v2252 = vadd.f32 %v2012, %v2247
    %s2253 = scalar_lea.vmem %s17, 1
    %v2254 = vld [vmem:[%s2253] sm:$0x1]
    %v2256 = vlaneseq
    %v2257 = vshrl.u32 %v2256, 7
    %v2258 = vsub.s32 0, %v2257
    %v2259 = vrot.slane %v2254, %v2258
    %v2261 = vadd.f32 %v2252, %v2259
    %v2263 = vrot.slane %v2261, 4
    %vm2265 = vcmask 1040384
    %v2266 = vsel %vm2265, %v2261, %v2263
    %v2267 = vld [vmem:[%s18] sm:$0x1]
    %v2268 = vld [vmem:[%s19] sm:$0x1]
    %v2269 = vsel %vm230, %v2266, 0.0
    %2270 = vadd.xlane.f32.xlu0 %v2269
    %v2271 = vpop.xlane.xlu0 %2270
    %v2272 = vmul.f32 %v2271, %v234
    %v2273 = vsub.f32 %v2266, %v2272
    %v2274 = vmul.f32 %v2273, %v2273
    %v2275 = vsel %vm230, %v2274, 0.0
    %2276 = vadd.xlane.f32.xlu0 %v2275
    %v2277 = vpop.xlane.xlu0 %2276
    %v2278 = vmul.f32 %v2277, %v234
    %v2279 = vadd.f32 %v2278, 1e-05
    %v2280 = vrsqrt.pop %v2279
    %v2281 = vmul.f32 %v2273, %v2280
    %v2283 = vlaneseq
    %v2284 = vshrl.u32 %v2283, 7
    %v2285 = vsub.s32 0, %v2284
    %v2286 = vrot.slane %v2267, %v2285
    %v2288 = vmul.f32 %v2281, %v2286
    %v2290 = vlaneseq
    %v2291 = vshrl.u32 %v2290, 7
    %v2292 = vsub.s32 0, %v2291
    %v2293 = vrot.slane %v2268, %v2292
    %v2295 = vadd.f32 %v2288, %v2293
    %v2296 = vpack.c.bf16 %v2295, %v2295
    %v2297 = vld [vmem:[%s20] sm:$0xf]
    %v2298 = vld [vmem:[%s20 + $0x4] sm:$0xf]
    %v2299 = vld [vmem:[%s20 + $0x8] sm:$0xf]
    %v2300 = vld [vmem:[%s20 + $0xc] sm:$0xf]
    %v2305 = vunpack.c.l.b16 %v2297
    %v2306 = vunpack.c.l.b16 %v2298
    %v2307 = vunpack.c.l.b16 %v2299
    %v2308 = vunpack.c.l.b16 %v2300
    %v2309 = vpack.c.b16 %v2306, %v2305
    %v2310 = vpack.c.b16 %v2308, %v2307
    %v2314 = vsel %vm226, %v2296, 0
    %2316 = vmatprep.subr.bf16.mxu0 0
    %2317 = vmatpush1.bf16.msra.mxu0 %v2309
    %2318 = vmatprep.subr.bf16.mxu0 0
    %2319 = vmatpush1.bf16.msra.mxu0 %v2310
    %2320 = vmatprep.subr.bf16.mxu0 0
    %2321 = vmatpush1.bf16.msra.mxu0 0
    %2322 = vmatprep.subr.bf16.mxu0 0
    %2323 = vmatpush1.bf16.msra.mxu0 0
    %2324 = vmatprep.subr.bf16.mxu0 0
    %2325 = vmatpush1.bf16.msra.mxu0 0
    %2326 = vmatprep.subr.bf16.mxu0 0
    %2327 = vmatpush1.bf16.msra.mxu0 0
    %2328 = vmatprep.subr.bf16.mxu0 0
    %2329 = vmatpush1.bf16.msra.mxu0 0
    %2330 = vmatprep.subr.bf16.mxu0 0
    %2331 = vmatpush1.bf16.msra.mxu0 0
    %2332 = vmatprep.subr.bf16.mxu0 0
    %2333 = vmatpush1.bf16.msra.mxu0 0
    %2334 = vmatprep.subr.bf16.mxu0 0
    %2335 = vmatpush1.bf16.msra.mxu0 0
    %2336 = vmatprep.subr.bf16.mxu0 0
    %2337 = vmatpush1.bf16.msra.mxu0 0
    %2338 = vmatprep.subr.bf16.mxu0 0
    %2339 = vmatpush1.bf16.msra.mxu0 0
    %2340 = vmatprep.subr.bf16.mxu0 0
    %2341 = vmatpush1.bf16.msra.mxu0 0
    %2342 = vmatprep.subr.bf16.mxu0 0
    %2343 = vmatpush1.bf16.msra.mxu0 0
    %2344 = vmatprep.subr.bf16.mxu0 0
    %2345 = vmatpush1.bf16.msra.mxu0 0
    %2346 = vmatprep.subr.bf16.mxu0 0
    %2347 = vmatpush1.bf16.msra.mxu0 0
    %2348 = vmatprep.mubr.bf16.mxu0 0
    %2349 = vmatmul.mubr.bf16.gmra.mrb[0].mxu0 %v2314
    %v2350 = vpop.f32.mrb[0].mxu0
    %v2351 = vadd.f32 0.0, %v2350
    %v2352 = vpop.f32.mrb[0].mxu0
    %v2353 = vpop.f32.mrb[0].mxu0
    %v2354 = vpop.f32.mrb[0].mxu0
    %2355 = vdwg.mxu0
    %vm2356 = vcmask 123904
    %2357 = vst.msk [vmem:[#allocation2] sm:$0x3] %vm2356, %v2351
    // Predicated region
    $region86: #{clip_encode_image.1} parent=1 // pred_check
      _
    $region87: #{clip_encode_image.1} parent=1 // pred_check_branch
      %2359 = sbr.rel (0) target = $region89
    $region88: #{clip_encode_image.1} parent=1 // pred_region
      %s2361 = ssub.s32 32, 32
      %2362 = vsyncadd [#allocation3], %s2361
      %s2364 = sshll.u32 [#allocation2], 4
      %s2365 = int_to_ptr.vmem [resolvable:$true] %s2364
      %2367 = dma.vmem_to_hbm [thread:$0]  %s2365, 32, %s21, [#allocation3]
    $region89: #{clip_encode_image.1} parent=1 // pred_fallthru
      _
    // Predicated region
    $region90: #{clip_encode_image.1} parent=1 // pred_check
      _
    $region91: #{clip_encode_image.1} parent=1 // pred_check_branch
      %2369 = sbr.rel (0) target = $region93
    $region92: #{clip_encode_image.1} parent=1 // pred_region
      %2370 = dma.done [#allocation3], 32
    $region93: #{clip_encode_image.1} parent=1 // pred_fallthru
      _
    %2371 = vsyncpa [#allocation3], 1

</llo_original>
